<compile_context>
chip_gen: v6e
topology: v6e:2x2x1
jax: 0.10.0
libtpu: 0.0.40
codegen_flags: <defaults>
</compile_context>

<pallas_src>
import math

import jax
import jax.numpy as jnp
from jax.experimental import pallas as pl
from jax.experimental.pallas import tpu as pltpu


def _round_up(v, m):
    return -(-v // m) * m


def _make_fused_kernel(layer_cfgs, chans, W_c, N_p, G, L, C_scr):
    """Build the fused multi-layer kernel (all shapes/offsets static)."""
    n_layers = len(layer_cfgs)

    def kernel(*refs):
        # refs = x, mask, interior, (w, b) per layer, y_out, slab, x_canvas, m_canvas
        x_ref, m_ref, interior_ref = refs[0], refs[1], refs[2]
        wb_refs = refs[3:3 + 2 * n_layers]
        y_ref = refs[3 + 2 * n_layers]
        slab_ref = refs[4 + 2 * n_layers]
        xcan_ref = refs[5 + 2 * n_layers]
        mcan_ref = refs[6 + 2 * n_layers]

        interior = interior_ref[...]                    # (1, N_p): 1 inside image, else 0

        # Zero the canvas guard bands ONCE per grid step (later layers only ever write
        # the [G, G+N_p) interior).  NOT gated on program_id: scratch is per-TensorCore.
        if n_layers > 1:
            tail = L - G - N_p
            xcan_ref[:, 0:G] = jnp.zeros((C_scr, G), jnp.float32)
            xcan_ref[:, G + N_p:L] = jnp.zeros((C_scr, tail), jnp.float32)
            mcan_ref[:, 0:G] = jnp.zeros((1, G), jnp.float32)
            mcan_ref[:, G + N_p:L] = jnp.zeros((1, tail), jnp.float32)

        xv_ref, mv_ref = x_ref, m_ref                   # layer-0 canvases (zero-guarded)
        for li, (k, _s, p, d) in enumerate(layer_cfgs):
            c_in, c_out = chans[li], chans[li + 1]
            kk = k * k
            k_rows = c_in * kk + kk                     # x-tap rows then mask-tap rows
            w_ref, b_ref = wb_refs[2 * li], wb_refs[2 * li + 1]

            # im2col: one shifted lane-dense copy per tap into the VMEM slab.
            for kh in range(k):
                for kw in range(k):
                    t = kh * k + kw
                    s0 = G + (kh * d - p) * W_c + (kw * d - p)      # static lane offset
                    slab_ref[t * c_in:(t + 1) * c_in, :] = xv_ref[0:c_in, s0:s0 + N_p]
                    slab_ref[c_in * kk + t:c_in * kk + t + 1, :] = mv_ref[:, s0:s0 + N_p]

            # One MXU matmul per layer: conv rows + one mask-count row.
            acc = jnp.dot(w_ref[...], slab_ref[0:k_rows, :],
                          preferred_element_type=jnp.float32)       # (c_out+1, N_p)
            yc = jnp.maximum(acc + b_ref[...], 0.0)                 # bias (cnt bias=0)+ReLU
            y = yc[0:c_out, :]                                      # conv activations
            cnt = yc[c_out:c_out + 1, :]                            # conv(mask, ones_kxk)

            safe = jnp.maximum(cnt, 1.0)
            inv = pl.reciprocal(safe, approx=True)                  # EUP reciprocal
            inv = inv * (2.0 - safe * inv)                          # Newton step -> ~exact
            mw_eff = jnp.where(cnt > 0.0, inv, 0.0) * interior      # masked_weight, margins 0
            y = y * mw_eff
            m_new = (mw_eff > 0.0).astype(jnp.float32)              # next padded_mask

            if li < n_layers - 1:
                # Lane-dense unmasked stores: G and N_p are both multiples of 128.
                xcan_ref[0:c_out, G:G + N_p] = y
                mcan_ref[:, G:G + N_p] = m_new
                xv_ref, mv_ref = xcan_ref, mcan_ref
            else:
                y_ref[...] = y

    return kernel


def map_conv_forward(x_nchw, mask_nchw, params, layer_cfgs):
    """MapConv.forward. x_nchw: (B, Cin, H, W), mask_nchw: (B, 1, H, W)."""
    B, C0, H, W = x_nchw.shape
    chans = [C0] + [w.shape[0] for (w, _) in params]
    f32 = jnp.float32

    for (k, s, p, d) in layer_cfgs:
        assert s == 1 and 2 * p == d * (k - 1), "fused kernel needs stride 1 / 'same' conv"

    # Shared canvas geometry: one padded plane of margin P reused by every layer.
    P = max(p for (_, _, p, _) in layer_cfgs)
    H_c, W_c = H + 2 * P, W + 2 * P
    N_c = H_c * W_c
    N_p = _round_up(N_c, 128)                           # lane-dense interior width
    guard = max(p * (W_c + 1) for (_, _, p, _) in layer_cfgs)   # max |tap lane offset|
    G = _round_up(guard, 128)                           # interior starts on a lane tile
    L = _round_up(G + N_p + guard, 128)                 # canvas length (lane multiple)

    # Layout glue (plain JAX, input only -- no per-tap HBM expansion).
    x = x_nchw.astype(f32)
    m = mask_nchw[:, 0].astype(f32)
    xc = jnp.pad(x, ((0, 0), (0, 0), (P, P), (P, P))).reshape(B, C0, N_c)
    mc = jnp.pad(m, ((0, 0), (P, P), (P, P))).reshape(B, 1, N_c)
    xf = jnp.pad(xc, ((0, 0), (0, 0), (G, L - G - N_c)))        # (B, C0, L)
    mf = jnp.pad(mc, ((0, 0), (0, 0), (G, L - G - N_c)))        # (B, 1, L)

    hh = jnp.arange(H_c)
    ww = jnp.arange(W_c)
    interior = (((hh >= P) & (hh < P + H))[:, None]
                & ((ww >= P) & (ww < P + W))[None, :]).astype(f32).reshape(1, N_c)
    interior = jnp.pad(interior, ((0, 0), (0, N_p - N_c)))      # (1, N_p)

    # Per-layer params -> dense im2col weights:
    #   W_mat (Cout+1, Cin*k*k + k*k): conv rows over the x-tap columns, one extra row of
    #   ones over the mask-tap columns (produces cnt); bias gets a 0 appended for that row.
    wb_inputs, wb_specs = [], []
    k_rows_max = 1
    for (w, b), (k, s, p, d) in zip(params, layer_cfgs):
        cout, cin = w.shape[0], w.shape[1]
        kk = k * k
        w_x = jnp.transpose(w, (0, 2, 3, 1)).reshape(cout, kk * cin).astype(f32)
        w_conv = jnp.concatenate([w_x, jnp.zeros((cout, kk), f32)], axis=1)
        w_cnt = jnp.concatenate([jnp.zeros((1, kk * cin), f32), jnp.ones((1, kk), f32)],
                                axis=1)
        w_mat = jnp.concatenate([w_conv, w_cnt], axis=0)         # (cout+1, krows)
        b_t = jnp.concatenate([b.astype(f32), jnp.zeros((1,), f32)]).reshape(cout + 1, 1)
        k_rows_max = max(k_rows_max, kk * cin + kk)
        wb_inputs += [w_mat, b_t]
        wb_specs += [pl.BlockSpec(tuple(w_mat.shape), lambda i: (0, 0)),
                     pl.BlockSpec(tuple(b_t.shape), lambda i: (0, 0))]

    C_last = chans[-1]
    C_scr = max(chans[1:-1] + [1])
    K_scr = _round_up(k_rows_max, 8)
    kernel = _make_fused_kernel(layer_cfgs, chans, W_c, N_p, G, L, C_scr)

    out = pl.pallas_call(
        kernel,
        grid=(B,),
        in_specs=[
            pl.BlockSpec((None, C0, L), lambda i: (i, 0, 0)),
            pl.BlockSpec((None, 1, L), lambda i: (i, 0, 0)),
            pl.BlockSpec((1, N_p), lambda i: (0, 0)),
        ] + wb_specs,
        out_specs=pl.BlockSpec((None, C_last, N_p), lambda i: (i, 0, 0)),
        out_shape=jax.ShapeDtypeStruct((B, C_last, N_p), f32),
        scratch_shapes=[
            pltpu.VMEM((K_scr, N_p), f32),     # im2col slab (x taps + mask taps)
            pltpu.VMEM((C_scr, L), f32),       # next-layer activation canvas
            pltpu.VMEM((1, L), f32),           # next-layer mask canvas
        ],
        compiler_params=pltpu.CompilerParams(dimension_semantics=("parallel",)),
    )(xf, mf, interior, *wb_inputs)

    # Crop the lane padding and extract the image interior; layout is already NCHW.
    return out[:, :, :N_c].reshape(B, C_last, H_c, W_c)[:, :, P:P + H, P:P + W]


def reference_forward(x, mask, params, layer_cfgs):
    """Pure-JAX reference mirroring the PyTorch module (NCHW)."""
    dn = ("NCHW", "OIHW", "NCHW")
    m = mask.astype(jnp.float32)
    for (w, b), (k, s, p, d) in zip(params, layer_cfgs):
        x = jax.lax.conv_general_dilated(
            x, w, (s, s), [(p, p), (p, p)], rhs_dilation=(d, d), dimension_numbers=dn)
        x = jax.nn.relu(x + b[None, :, None, None])
        ones = jnp.ones((1, 1, k, k), jnp.float32)
        cnt = jnp.round(jax.lax.conv_general_dilated(
            m, ones, (s, s), [(p, p), (p, p)], rhs_dilation=(d, d), dimension_numbers=dn))
        mw = jnp.where(cnt > 0, 1.0 / jnp.maximum(cnt, 1.0), 0.0)
        m = (mw > 0).astype(jnp.float32)
        x = x * mw
    return x


if __name__ == "__main__":
    key = jax.random.PRNGKey(0)

    # cfg: INPUT_SIZE=4, HIDDEN_SIZES=[8,8], KERNEL_SIZES=[3,3],
    #      STRIDES=[1,1], PADDINGS=[1,2], DILATIONS=[1,2]
    B, C, H, W = 2, 4, 16, 16
    HIDDEN_SIZES = [8, 8]
    KERNEL_SIZES = [3, 3]
    STRIDES = [1, 1]
    PADDINGS = [1, 2]
    DILATIONS = [1, 2]
    layer_cfgs = list(zip(KERNEL_SIZES, STRIDES, PADDINGS, DILATIONS))

    # deterministic parameter init (torch Conv2d default: U(-1/sqrt(fan_in), 1/sqrt(fan_in)))
    chans = [C] + HIDDEN_SIZES
    params = []
    for i, (k, s, p, d) in enumerate(layer_cfgs):
        key, kw_key, kb_key = jax.random.split(key, 3)
        cin, cout = chans[i], chans[i + 1]
        bound = 1.0 / math.sqrt(cin * k * k)
        wgt = jax.random.uniform(kw_key, (cout, cin, k, k), jnp.float32, -bound, bound)
        bias = jax.random.uniform(kb_key, (cout,), jnp.float32, -bound, bound)
        params.append((wgt, bias))

    key, kx = jax.random.split(key)
    x = jax.random.normal(kx, (B, C, H, W), jnp.float32)
    # 2D-TAN style valid-proposal mask: upper-triangular (end >= start)
    ii = jnp.arange(H)[:, None]
    jj = jnp.arange(W)[None, :]
    mask = jnp.tile((jj >= ii).astype(jnp.float32)[None, None], (B, 1, 1, 1))

    out = map_conv_forward(x, mask, params, layer_cfgs)
    out = jax.block_until_ready(out)

    ref = reference_forward(x, mask, params, layer_cfgs)
    assert out.shape == ref.shape == (B, HIDDEN_SIZES[-1], H, W)
    assert jnp.allclose(out, ref, atol=5e-4, rtol=5e-4), float(jnp.max(jnp.abs(out - ref)))

    print("KERNEL_OK")
</pallas_src>

<mosaic_0001>
module attributes {stable_mosaic.version = 11 : i64} {
  func.func @kernel(%arg0: i32, %arg1: memref<1x4x768xf32, #tpu.memory_space<vmem>>, %arg2: memref<1x1x768xf32, #tpu.memory_space<vmem>>, %arg3: memref<1x512xf32, #tpu.memory_space<vmem>>, %arg4: memref<9x45xf32, #tpu.memory_space<vmem>>, %arg5: memref<9x1xf32, #tpu.memory_space<vmem>>, %arg6: memref<9x81xf32, #tpu.memory_space<vmem>>, %arg7: memref<9x1xf32, #tpu.memory_space<vmem>>, %arg8: memref<1x8x512xf32, #tpu.memory_space<vmem>>, %arg9: memref<88x512xf32, #tpu.memory_space<vmem>>, %arg10: memref<8x768xf32, #tpu.memory_space<vmem>>, %arg11: memref<1x768xf32, #tpu.memory_space<vmem>>) attributes {dimension_semantics = [#tpu.dimension_semantics<parallel>], iteration_bounds = array<i64: 2>, scalar_prefetch = 0 : i64, scratch_operands = 3 : i64, tpu.core_type = #tpu.core_type<tc>, window_params = [{transform_indices = @transform_0, window_bounds = array<i64: 1, 4, 768>}, {transform_indices = @transform_1, window_bounds = array<i64: 1, 1, 768>}, {pipeline_mode = #tpu.pipeline_mode<synchronous>, transform_indices = @transform_2, window_bounds = array<i64: 1, 512>}, {pipeline_mode = #tpu.pipeline_mode<synchronous>, transform_indices = @transform_3, window_bounds = array<i64: 9, 45>}, {pipeline_mode = #tpu.pipeline_mode<synchronous>, transform_indices = @transform_4, window_bounds = array<i64: 9, 1>}, {pipeline_mode = #tpu.pipeline_mode<synchronous>, transform_indices = @transform_5, window_bounds = array<i64: 9, 81>}, {pipeline_mode = #tpu.pipeline_mode<synchronous>, transform_indices = @transform_6, window_bounds = array<i64: 9, 1>}, {transform_indices = @transform_7, window_bounds = array<i64: 1, 8, 512>}]} {
    %c0 = arith.constant 0 : index
    %c0_0 = arith.constant 0 : index
    %0 = vector.load %arg3[%c0, %c0_0] : memref<1x512xf32, #tpu.memory_space<vmem>>, vector<1x512xf32>
    %cst = arith.constant 0.000000e+00 : f32
    %1 = vector.broadcast %cst : f32 to vector<8x128xf32>
    %c0_1 = arith.constant 0 : index
    %c0_2 = arith.constant 0 : index
    %2 = vector.load %arg10[%c0_1, %c0_2] : memref<8x768xf32, #tpu.memory_space<vmem>>, vector<8x128xf32>
    tpu.vector_store %arg10[%c0_1, %c0_2], %1 {strides = array<i32>} : memref<8x768xf32, #tpu.memory_space<vmem>>, vector<8x128xf32>,
    %cst_3 = arith.constant 0.000000e+00 : f32
    %3 = vector.broadcast %cst_3 : f32 to vector<8x128xf32>
    %c0_4 = arith.constant 0 : index
    %c640 = arith.constant 640 : index
    %4 = vector.load %arg10[%c0_4, %c640] : memref<8x768xf32, #tpu.memory_space<vmem>>, vector<8x128xf32>
    tpu.vector_store %arg10[%c0_4, %c640], %3 {strides = array<i32>} : memref<8x768xf32, #tpu.memory_space<vmem>>, vector<8x128xf32>,
    %cst_5 = arith.constant 0.000000e+00 : f32
    %5 = vector.broadcast %cst_5 : f32 to vector<1x128xf32>
    %c0_6 = arith.constant 0 : index
    %c0_7 = arith.constant 0 : index
    %6 = vector.load %arg11[%c0_6, %c0_7] : memref<1x768xf32, #tpu.memory_space<vmem>>, vector<1x128xf32>
    tpu.vector_store %arg11[%c0_6, %c0_7], %5 {strides = array<i32>} : memref<1x768xf32, #tpu.memory_space<vmem>>, vector<1x128xf32>,
    %cst_8 = arith.constant 0.000000e+00 : f32
    %7 = vector.broadcast %cst_8 : f32 to vector<1x128xf32>
    %c0_9 = arith.constant 0 : index
    %c640_10 = arith.constant 640 : index
    %8 = vector.load %arg11[%c0_9, %c640_10] : memref<1x768xf32, #tpu.memory_space<vmem>>, vector<1x128xf32>
    tpu.vector_store %arg11[%c0_9, %c640_10], %7 {strides = array<i32>} : memref<1x768xf32, #tpu.memory_space<vmem>>, vector<1x128xf32>,
    %c0_11 = arith.constant 0 : index
    %c0_12 = arith.constant 0 : index
    %c107 = arith.constant 107 : index
    %9 = vector.load %arg1[%c0_11, %c0_12, %c107] : memref<1x4x768xf32, #tpu.memory_space<vmem>>, vector<1x4x512xf32>
    %10 = vector.shape_cast %9 : vector<1x4x512xf32> to vector<4x512xf32>
    %c0_13 = arith.constant 0 : index
    %c0_14 = arith.constant 0 : index
    %11 = vector.load %arg9[%c0_13, %c0_14] : memref<88x512xf32, #tpu.memory_space<vmem>>, vector<4x512xf32>
    tpu.vector_store %arg9[%c0_13, %c0_14], %10 {strides = array<i32>} : memref<88x512xf32, #tpu.memory_space<vmem>>, vector<4x512xf32>,
    %c0_15 = arith.constant 0 : index
    %c0_16 = arith.constant 0 : index
    %c107_17 = arith.constant 107 : index
    %12 = vector.load %arg2[%c0_15, %c0_16, %c107_17] : memref<1x1x768xf32, #tpu.memory_space<vmem>>, vector<1x1x512xf32>
    %13 = vector.shape_cast %12 : vector<1x1x512xf32> to vector<1x512xf32>
    %c36 = arith.constant 36 : index
    %c0_18 = arith.constant 0 : index
    %14 = vector.load %arg9[%c36, %c0_18] : memref<88x512xf32, #tpu.memory_space<vmem>>, vector<1x512xf32>
    tpu.vector_store %arg9[%c36, %c0_18], %13 {strides = array<i32>} : memref<88x512xf32, #tpu.memory_space<vmem>>, vector<1x512xf32>,
    %c0_19 = arith.constant 0 : index
    %c0_20 = arith.constant 0 : index
    %c108 = arith.constant 108 : index
    %15 = vector.load %arg1[%c0_19, %c0_20, %c108] : memref<1x4x768xf32, #tpu.memory_space<vmem>>, vector<1x4x512xf32>
    %16 = vector.shape_cast %15 : vector<1x4x512xf32> to vector<4x512xf32>
    %c4 = arith.constant 4 : index
    %c0_21 = arith.constant 0 : index
    %17 = vector.load %arg9[%c4, %c0_21] : memref<88x512xf32, #tpu.memory_space<vmem>>, vector<4x512xf32>
    tpu.vector_store %arg9[%c4, %c0_21], %16 {strides = array<i32>} : memref<88x512xf32, #tpu.memory_space<vmem>>, vector<4x512xf32>,
    %c0_22 = arith.constant 0 : index
    %c0_23 = arith.constant 0 : index
    %c108_24 = arith.constant 108 : index
    %18 = vector.load %arg2[%c0_22, %c0_23, %c108_24] : memref<1x1x768xf32, #tpu.memory_space<vmem>>, vector<1x1x512xf32>
    %19 = vector.shape_cast %18 : vector<1x1x512xf32> to vector<1x512xf32>
    %c37 = arith.constant 37 : index
    %c0_25 = arith.constant 0 : index
    %20 = vector.load %arg9[%c37, %c0_25] : memref<88x512xf32, #tpu.memory_space<vmem>>, vector<1x512xf32>
    tpu.vector_store %arg9[%c37, %c0_25], %19 {strides = array<i32>} : memref<88x512xf32, #tpu.memory_space<vmem>>, vector<1x512xf32>,
    %c0_26 = arith.constant 0 : index
    %c0_27 = arith.constant 0 : index
    %c109 = arith.constant 109 : index
    %21 = vector.load %arg1[%c0_26, %c0_27, %c109] : memref<1x4x768xf32, #tpu.memory_space<vmem>>, vector<1x4x512xf32>
    %22 = vector.shape_cast %21 : vector<1x4x512xf32> to vector<4x512xf32>
    %c8 = arith.constant 8 : index
    %c0_28 = arith.constant 0 : index
    %23 = vector.load %arg9[%c8, %c0_28] : memref<88x512xf32, #tpu.memory_space<vmem>>, vector<4x512xf32>
    tpu.vector_store %arg9[%c8, %c0_28], %22 {strides = array<i32>} : memref<88x512xf32, #tpu.memory_space<vmem>>, vector<4x512xf32>,
    %c0_29 = arith.constant 0 : index
    %c0_30 = arith.constant 0 : index
    %c109_31 = arith.constant 109 : index
    %24 = vector.load %arg2[%c0_29, %c0_30, %c109_31] : memref<1x1x768xf32, #tpu.memory_space<vmem>>, vector<1x1x512xf32>
    %25 = vector.shape_cast %24 : vector<1x1x512xf32> to vector<1x512xf32>
    %c38 = arith.constant 38 : index
    %c0_32 = arith.constant 0 : index
    %26 = vector.load %arg9[%c38, %c0_32] : memref<88x512xf32, #tpu.memory_space<vmem>>, vector<1x512xf32>
    tpu.vector_store %arg9[%c38, %c0_32], %25 {strides = array<i32>} : memref<88x512xf32, #tpu.memory_space<vmem>>, vector<1x512xf32>,
    %c0_33 = arith.constant 0 : index
    %c0_34 = arith.constant 0 : index
    %c127 = arith.constant 127 : index
    %27 = vector.load %arg1[%c0_33, %c0_34, %c127] : memref<1x4x768xf32, #tpu.memory_space<vmem>>, vector<1x4x512xf32>
    %28 = vector.shape_cast %27 : vector<1x4x512xf32> to vector<4x512xf32>
    %c12 = arith.constant 12 : index
    %c0_35 = arith.constant 0 : index
    %29 = vector.load %arg9[%c12, %c0_35] : memref<88x512xf32, #tpu.memory_space<vmem>>, vector<4x512xf32>
    tpu.vector_store %arg9[%c12, %c0_35], %28 {strides = array<i32>} : memref<88x512xf32, #tpu.memory_space<vmem>>, vector<4x512xf32>,
    %c0_36 = arith.constant 0 : index
    %c0_37 = arith.constant 0 : index
    %c127_38 = arith.constant 127 : index
    %30 = vector.load %arg2[%c0_36, %c0_37, %c127_38] : memref<1x1x768xf32, #tpu.memory_space<vmem>>, vector<1x1x512xf32>
    %31 = vector.shape_cast %30 : vector<1x1x512xf32> to vector<1x512xf32>
    %c39 = arith.constant 39 : index
    %c0_39 = arith.constant 0 : index
    %32 = vector.load %arg9[%c39, %c0_39] : memref<88x512xf32, #tpu.memory_space<vmem>>, vector<1x512xf32>
    tpu.vector_store %arg9[%c39, %c0_39], %31 {strides = array<i32>} : memref<88x512xf32, #tpu.memory_space<vmem>>, vector<1x512xf32>,
    %c0_40 = arith.constant 0 : index
    %c0_41 = arith.constant 0 : index
    %c128 = arith.constant 128 : index
    %33 = vector.load %arg1[%c0_40, %c0_41, %c128] : memref<1x4x768xf32, #tpu.memory_space<vmem>>, vector<1x4x512xf32>
    %34 = vector.shape_cast %33 : vector<1x4x512xf32> to vector<4x512xf32>
    %c16 = arith.constant 16 : index
    %c0_42 = arith.constant 0 : index
    %35 = vector.load %arg9[%c16, %c0_42] : memref<88x512xf32, #tpu.memory_space<vmem>>, vector<4x512xf32>
    tpu.vector_store %arg9[%c16, %c0_42], %34 {strides = array<i32>} : memref<88x512xf32, #tpu.memory_space<vmem>>, vector<4x512xf32>,
    %c0_43 = arith.constant 0 : index
    %c0_44 = arith.constant 0 : index
    %c128_45 = arith.constant 128 : index
    %36 = vector.load %arg2[%c0_43, %c0_44, %c128_45] : memref<1x1x768xf32, #tpu.memory_space<vmem>>, vector<1x1x512xf32>
    %37 = vector.shape_cast %36 : vector<1x1x512xf32> to vector<1x512xf32>
    %c40 = arith.constant 40 : index
    %c0_46 = arith.constant 0 : index
    %38 = vector.load %arg9[%c40, %c0_46] : memref<88x512xf32, #tpu.memory_space<vmem>>, vector<1x512xf32>
    tpu.vector_store %arg9[%c40, %c0_46], %37 {strides = array<i32>} : memref<88x512xf32, #tpu.memory_space<vmem>>, vector<1x512xf32>,
    %c0_47 = arith.constant 0 : index
    %c0_48 = arith.constant 0 : index
    %c129 = arith.constant 129 : index
    %39 = vector.load %arg1[%c0_47, %c0_48, %c129] : memref<1x4x768xf32, #tpu.memory_space<vmem>>, vector<1x4x512xf32>
    %40 = vector.shape_cast %39 : vector<1x4x512xf32> to vector<4x512xf32>
    %c20 = arith.constant 20 : index
    %c0_49 = arith.constant 0 : index
    %41 = vector.load %arg9[%c20, %c0_49] : memref<88x512xf32, #tpu.memory_space<vmem>>, vector<4x512xf32>
    tpu.vector_store %arg9[%c20, %c0_49], %40 {strides = array<i32>} : memref<88x512xf32, #tpu.memory_space<vmem>>, vector<4x512xf32>,
    %c0_50 = arith.constant 0 : index
    %c0_51 = arith.constant 0 : index
    %c129_52 = arith.constant 129 : index
    %42 = vector.load %arg2[%c0_50, %c0_51, %c129_52] : memref<1x1x768xf32, #tpu.memory_space<vmem>>, vector<1x1x512xf32>
    %43 = vector.shape_cast %42 : vector<1x1x512xf32> to vector<1x512xf32>
    %c41 = arith.constant 41 : index
    %c0_53 = arith.constant 0 : index
    %44 = vector.load %arg9[%c41, %c0_53] : memref<88x512xf32, #tpu.memory_space<vmem>>, vector<1x512xf32>
    tpu.vector_store %arg9[%c41, %c0_53], %43 {strides = array<i32>} : memref<88x512xf32, #tpu.memory_space<vmem>>, vector<1x512xf32>,
    %c0_54 = arith.constant 0 : index
    %c0_55 = arith.constant 0 : index
    %c147 = arith.constant 147 : index
    %45 = vector.load %arg1[%c0_54, %c0_55, %c147] : memref<1x4x768xf32, #tpu.memory_space<vmem>>, vector<1x4x512xf32>
    %46 = vector.shape_cast %45 : vector<1x4x512xf32> to vector<4x512xf32>
    %c24 = arith.constant 24 : index
    %c0_56 = arith.constant 0 : index
    %47 = vector.load %arg9[%c24, %c0_56] : memref<88x512xf32, #tpu.memory_space<vmem>>, vector<4x512xf32>
    tpu.vector_store %arg9[%c24, %c0_56], %46 {strides = array<i32>} : memref<88x512xf32, #tpu.memory_space<vmem>>, vector<4x512xf32>,
    %c0_57 = arith.constant 0 : index
    %c0_58 = arith.constant 0 : index
    %c147_59 = arith.constant 147 : index
    %48 = vector.load %arg2[%c0_57, %c0_58, %c147_59] : memref<1x1x768xf32, #tpu.memory_space<vmem>>, vector<1x1x512xf32>
    %49 = vector.shape_cast %48 : vector<1x1x512xf32> to vector<1x512xf32>
    %c42 = arith.constant 42 : index
    %c0_60 = arith.constant 0 : index
    %50 = vector.load %arg9[%c42, %c0_60] : memref<88x512xf32, #tpu.memory_space<vmem>>, vector<1x512xf32>
    tpu.vector_store %arg9[%c42, %c0_60], %49 {strides = array<i32>} : memref<88x512xf32, #tpu.memory_space<vmem>>, vector<1x512xf32>,
    %c0_61 = arith.constant 0 : index
    %c0_62 = arith.constant 0 : index
    %c148 = arith.constant 148 : index
    %51 = vector.load %arg1[%c0_61, %c0_62, %c148] : memref<1x4x768xf32, #tpu.memory_space<vmem>>, vector<1x4x512xf32>
    %52 = vector.shape_cast %51 : vector<1x4x512xf32> to vector<4x512xf32>
    %c28 = arith.constant 28 : index
    %c0_63 = arith.constant 0 : index
    %53 = vector.load %arg9[%c28, %c0_63] : memref<88x512xf32, #tpu.memory_space<vmem>>, vector<4x512xf32>
    tpu.vector_store %arg9[%c28, %c0_63], %52 {strides = array<i32>} : memref<88x512xf32, #tpu.memory_space<vmem>>, vector<4x512xf32>,
    %c0_64 = arith.constant 0 : index
    %c0_65 = arith.constant 0 : index
    %c148_66 = arith.constant 148 : index
    %54 = vector.load %arg2[%c0_64, %c0_65, %c148_66] : memref<1x1x768xf32, #tpu.memory_space<vmem>>, vector<1x1x512xf32>
    %55 = vector.shape_cast %54 : vector<1x1x512xf32> to vector<1x512xf32>
    %c43 = arith.constant 43 : index
    %c0_67 = arith.constant 0 : index
    %56 = vector.load %arg9[%c43, %c0_67] : memref<88x512xf32, #tpu.memory_space<vmem>>, vector<1x512xf32>
    tpu.vector_store %arg9[%c43, %c0_67], %55 {strides = array<i32>} : memref<88x512xf32, #tpu.memory_space<vmem>>, vector<1x512xf32>,
    %c0_68 = arith.constant 0 : index
    %c0_69 = arith.constant 0 : index
    %c149 = arith.constant 149 : index
    %57 = vector.load %arg1[%c0_68, %c0_69, %c149] : memref<1x4x768xf32, #tpu.memory_space<vmem>>, vector<1x4x512xf32>
    %58 = vector.shape_cast %57 : vector<1x4x512xf32> to vector<4x512xf32>
    %c32 = arith.constant 32 : index
    %c0_70 = arith.constant 0 : index
    %59 = vector.load %arg9[%c32, %c0_70] : memref<88x512xf32, #tpu.memory_space<vmem>>, vector<4x512xf32>
    tpu.vector_store %arg9[%c32, %c0_70], %58 {strides = array<i32>} : memref<88x512xf32, #tpu.memory_space<vmem>>, vector<4x512xf32>,
    %c0_71 = arith.constant 0 : index
    %c0_72 = arith.constant 0 : index
    %c149_73 = arith.constant 149 : index
    %60 = vector.load %arg2[%c0_71, %c0_72, %c149_73] : memref<1x1x768xf32, #tpu.memory_space<vmem>>, vector<1x1x512xf32>
    %61 = vector.shape_cast %60 : vector<1x1x512xf32> to vector<1x512xf32>
    %c44 = arith.constant 44 : index
    %c0_74 = arith.constant 0 : index
    %62 = vector.load %arg9[%c44, %c0_74] : memref<88x512xf32, #tpu.memory_space<vmem>>, vector<1x512xf32>
    tpu.vector_store %arg9[%c44, %c0_74], %61 {strides = array<i32>} : memref<88x512xf32, #tpu.memory_space<vmem>>, vector<1x512xf32>,
    %c0_75 = arith.constant 0 : index
    %c0_76 = arith.constant 0 : index
    %63 = vector.load %arg4[%c0_75, %c0_76] : memref<9x45xf32, #tpu.memory_space<vmem>>, vector<9x45xf32>
    %c0_77 = arith.constant 0 : index
    %c0_78 = arith.constant 0 : index
    %64 = vector.load %arg9[%c0_77, %c0_78] : memref<88x512xf32, #tpu.memory_space<vmem>>, vector<45x512xf32>
    %cst_79 = arith.constant dense<0.000000e+00> : vector<9x512xf32>
    %65 = tpu.matmul %63, %64, %cst_79 {dimension_numbers = #tpu.dot_dimension_numbers<[1], [0], [0], [1], [0, 0, 1, 1], [], []>} : vector<9x45xf32>, vector<45x512xf32>, vector<9x512xf32> -> vector<9x512xf32>
    %c0_80 = arith.constant 0 : index
    %c0_81 = arith.constant 0 : index
    %66 = vector.load %arg5[%c0_80, %c0_81] : memref<9x1xf32, #tpu.memory_space<vmem>>, vector<9x1xf32>
    %67 = vector.broadcast %66 : vector<9x1xf32> to vector<9x512xf32>
    %68 = arith.addf %65, %67 : vector<9x512xf32>
    %cst_82 = arith.constant 0.000000e+00 : f32
    %69 = vector.broadcast %cst_82 : f32 to vector<9x512xf32>
    %70 = arith.maximumf %68, %69 : vector<9x512xf32>
    %71 = vector.extract_strided_slice %70 {offsets = [0, 0], sizes = [8, 512], strides = [1, 1]} : vector<9x512xf32> to vector<8x512xf32>
    %72 = vector.extract_strided_slice %70 {offsets = [8, 0], sizes = [1, 512], strides = [1, 1]} : vector<9x512xf32> to vector<1x512xf32>
    %cst_83 = arith.constant 1.000000e+00 : f32
    %73 = vector.broadcast %cst_83 : f32 to vector<1x512xf32>
    %74 = arith.maximumf %72, %73 : vector<1x512xf32>
    %75 = tpu.reciprocal %74 {approx = true} : vector<1x512xf32> -> vector<1x512xf32>
    %76 = arith.mulf %74, %75 : vector<1x512xf32>
    %cst_84 = arith.constant 2.000000e+00 : f32
    %77 = vector.broadcast %cst_84 : f32 to vector<1x512xf32>
    %78 = arith.subf %77, %76 : vector<1x512xf32>
    %79 = arith.mulf %75, %78 : vector<1x512xf32>
    %cst_85 = arith.constant 0.000000e+00 : f32
    %80 = vector.broadcast %cst_85 : f32 to vector<1x512xf32>
    %81 = arith.cmpf ogt, %72, %80 : vector<1x512xf32>
    %cst_86 = arith.constant 0.000000e+00 : f32
    %82 = vector.broadcast %cst_86 : f32 to vector<1x512xf32>
    %83 = arith.select %81, %79, %82 : vector<1x512xi1>, vector<1x512xf32>
    %84 = arith.mulf %83, %0 : vector<1x512xf32>
    %85 = vector.broadcast %84 : vector<1x512xf32> to vector<8x512xf32>
    %86 = arith.mulf %71, %85 : vector<8x512xf32>
    %cst_87 = arith.constant 0.000000e+00 : f32
    %87 = vector.broadcast %cst_87 : f32 to vector<1x512xf32>
    %88 = arith.cmpf ogt, %84, %87 : vector<1x512xf32>
    %89 = arith.extui %88 : vector<1x512xi1> to vector<1x512xi32>
    %90 = arith.sitofp %89 : vector<1x512xi32> to vector<1x512xf32>
    %c0_88 = arith.constant 0 : index
    %c128_89 = arith.constant 128 : index
    %91 = vector.load %arg10[%c0_88, %c128_89] : memref<8x768xf32, #tpu.memory_space<vmem>>, vector<8x512xf32>
    tpu.vector_store %arg10[%c0_88, %c128_89], %86 {strides = array<i32>} : memref<8x768xf32, #tpu.memory_space<vmem>>, vector<8x512xf32>,
    %c0_90 = arith.constant 0 : index
    %c128_91 = arith.constant 128 : index
    %92 = vector.load %arg11[%c0_90, %c128_91] : memref<1x768xf32, #tpu.memory_space<vmem>>, vector<1x512xf32>
    tpu.vector_store %arg11[%c0_90, %c128_91], %90 {strides = array<i32>} : memref<1x768xf32, #tpu.memory_space<vmem>>, vector<1x512xf32>,
    %c0_92 = arith.constant 0 : index
    %c86 = arith.constant 86 : index
    %93 = vector.load %arg10[%c0_92, %c86] : memref<8x768xf32, #tpu.memory_space<vmem>>, vector<8x512xf32>
    %c0_93 = arith.constant 0 : index
    %c0_94 = arith.constant 0 : index
    %94 = vector.load %arg9[%c0_93, %c0_94] : memref<88x512xf32, #tpu.memory_space<vmem>>, vector<8x512xf32>
    tpu.vector_store %arg9[%c0_93, %c0_94], %93 {strides = array<i32>} : memref<88x512xf32, #tpu.memory_space<vmem>>, vector<8x512xf32>,
    %c0_95 = arith.constant 0 : index
    %c86_96 = arith.constant 86 : index
    %95 = vector.load %arg11[%c0_95, %c86_96] : memref<1x768xf32, #tpu.memory_space<vmem>>, vector<1x512xf32>
    %c72 = arith.constant 72 : index
    %c0_97 = arith.constant 0 : index
    %96 = vector.load %arg9[%c72, %c0_97] : memref<88x512xf32, #tpu.memory_space<vmem>>, vector<1x512xf32>
    tpu.vector_store %arg9[%c72, %c0_97], %95 {strides = array<i32>} : memref<88x512xf32, #tpu.memory_space<vmem>>, vector<1x512xf32>,
    %c0_98 = arith.constant 0 : index
    %c88 = arith.constant 88 : index
    %97 = vector.load %arg10[%c0_98, %c88] : memref<8x768xf32, #tpu.memory_space<vmem>>, vector<8x512xf32>
    %c8_99 = arith.constant 8 : index
    %c0_100 = arith.constant 0 : index
    %98 = vector.load %arg9[%c8_99, %c0_100] : memref<88x512xf32, #tpu.memory_space<vmem>>, vector<8x512xf32>
    tpu.vector_store %arg9[%c8_99, %c0_100], %97 {strides = array<i32>} : memref<88x512xf32, #tpu.memory_space<vmem>>, vector<8x512xf32>,
    %c0_101 = arith.constant 0 : index
    %c88_102 = arith.constant 88 : index
    %99 = vector.load %arg11[%c0_101, %c88_102] : memref<1x768xf32, #tpu.memory_space<vmem>>, vector<1x512xf32>
    %c73 = arith.constant 73 : index
    %c0_103 = arith.constant 0 : index
    %100 = vector.load %arg9[%c73, %c0_103] : memref<88x512xf32, #tpu.memory_space<vmem>>, vector<1x512xf32>
    tpu.vector_store %arg9[%c73, %c0_103], %99 {strides = array<i32>} : memref<88x512xf32, #tpu.memory_space<vmem>>, vector<1x512xf32>,
    %c0_104 = arith.constant 0 : index
    %c90 = arith.constant 90 : index
    %101 = vector.load %arg10[%c0_104, %c90] : memref<8x768xf32, #tpu.memory_space<vmem>>, vector<8x512xf32>
    %c16_105 = arith.constant 16 : index
    %c0_106 = arith.constant 0 : index
    %102 = vector.load %arg9[%c16_105, %c0_106] : memref<88x512xf32, #tpu.memory_space<vmem>>, vector<8x512xf32>
    tpu.vector_store %arg9[%c16_105, %c0_106], %101 {strides = array<i32>} : memref<88x512xf32, #tpu.memory_space<vmem>>, vector<8x512xf32>,
    %c0_107 = arith.constant 0 : index
    %c90_108 = arith.constant 90 : index
    %103 = vector.load %arg11[%c0_107, %c90_108] : memref<1x768xf32, #tpu.memory_space<vmem>>, vector<1x512xf32>
    %c74 = arith.constant 74 : index
    %c0_109 = arith.constant 0 : index
    %104 = vector.load %arg9[%c74, %c0_109] : memref<88x512xf32, #tpu.memory_space<vmem>>, vector<1x512xf32>
    tpu.vector_store %arg9[%c74, %c0_109], %103 {strides = array<i32>} : memref<88x512xf32, #tpu.memory_space<vmem>>, vector<1x512xf32>,
    %c0_110 = arith.constant 0 : index
    %c126 = arith.constant 126 : index
    %105 = vector.load %arg10[%c0_110, %c126] : memref<8x768xf32, #tpu.memory_space<vmem>>, vector<8x512xf32>
    %c24_111 = arith.constant 24 : index
    %c0_112 = arith.constant 0 : index
    %106 = vector.load %arg9[%c24_111, %c0_112] : memref<88x512xf32, #tpu.memory_space<vmem>>, vector<8x512xf32>
    tpu.vector_store %arg9[%c24_111, %c0_112], %105 {strides = array<i32>} : memref<88x512xf32, #tpu.memory_space<vmem>>, vector<8x512xf32>,
    %c0_113 = arith.constant 0 : index
    %c126_114 = arith.constant 126 : index
    %107 = vector.load %arg11[%c0_113, %c126_114] : memref<1x768xf32, #tpu.memory_space<vmem>>, vector<1x512xf32>
    %c75 = arith.constant 75 : index
    %c0_115 = arith.constant 0 : index
    %108 = vector.load %arg9[%c75, %c0_115] : memref<88x512xf32, #tpu.memory_space<vmem>>, vector<1x512xf32>
    tpu.vector_store %arg9[%c75, %c0_115], %107 {strides = array<i32>} : memref<88x512xf32, #tpu.memory_space<vmem>>, vector<1x512xf32>,
    %c0_116 = arith.constant 0 : index
    %c128_117 = arith.constant 128 : index
    %109 = vector.load %arg10[%c0_116, %c128_117] : memref<8x768xf32, #tpu.memory_space<vmem>>, vector<8x512xf32>
    %c32_118 = arith.constant 32 : index
    %c0_119 = arith.constant 0 : index
    %110 = vector.load %arg9[%c32_118, %c0_119] : memref<88x512xf32, #tpu.memory_space<vmem>>, vector<8x512xf32>
    tpu.vector_store %arg9[%c32_118, %c0_119], %109 {strides = array<i32>} : memref<88x512xf32, #tpu.memory_space<vmem>>, vector<8x512xf32>,
    %c0_120 = arith.constant 0 : index
    %c128_121 = arith.constant 128 : index
    %111 = vector.load %arg11[%c0_120, %c128_121] : memref<1x768xf32, #tpu.memory_space<vmem>>, vector<1x512xf32>
    %c76 = arith.constant 76 : index
    %c0_122 = arith.constant 0 : index
    %112 = vector.load %arg9[%c76, %c0_122] : memref<88x512xf32, #tpu.memory_space<vmem>>, vector<1x512xf32>
    tpu.vector_store %arg9[%c76, %c0_122], %111 {strides = array<i32>} : memref<88x512xf32, #tpu.memory_space<vmem>>, vector<1x512xf32>,
    %c0_123 = arith.constant 0 : index
    %c130 = arith.constant 130 : index
    %113 = vector.load %arg10[%c0_123, %c130] : memref<8x768xf32, #tpu.memory_space<vmem>>, vector<8x512xf32>
    %c40_124 = arith.constant 40 : index
    %c0_125 = arith.constant 0 : index
    %114 = vector.load %arg9[%c40_124, %c0_125] : memref<88x512xf32, #tpu.memory_space<vmem>>, vector<8x512xf32>
    tpu.vector_store %arg9[%c40_124, %c0_125], %113 {strides = array<i32>} : memref<88x512xf32, #tpu.memory_space<vmem>>, vector<8x512xf32>,
    %c0_126 = arith.constant 0 : index
    %c130_127 = arith.constant 130 : index
    %115 = vector.load %arg11[%c0_126, %c130_127] : memref<1x768xf32, #tpu.memory_space<vmem>>, vector<1x512xf32>
    %c77 = arith.constant 77 : index
    %c0_128 = arith.constant 0 : index
    %116 = vector.load %arg9[%c77, %c0_128] : memref<88x512xf32, #tpu.memory_space<vmem>>, vector<1x512xf32>
    tpu.vector_store %arg9[%c77, %c0_128], %115 {strides = array<i32>} : memref<88x512xf32, #tpu.memory_space<vmem>>, vector<1x512xf32>,
    %c0_129 = arith.constant 0 : index
    %c166 = arith.constant 166 : index
    %117 = vector.load %arg10[%c0_129, %c166] : memref<8x768xf32, #tpu.memory_space<vmem>>, vector<8x512xf32>
    %c48 = arith.constant 48 : index
    %c0_130 = arith.constant 0 : index
    %118 = vector.load %arg9[%c48, %c0_130] : memref<88x512xf32, #tpu.memory_space<vmem>>, vector<8x512xf32>
    tpu.vector_store %arg9[%c48, %c0_130], %117 {strides = array<i32>} : memref<88x512xf32, #tpu.memory_space<vmem>>, vector<8x512xf32>,
    %c0_131 = arith.constant 0 : index
    %c166_132 = arith.constant 166 : index
    %119 = vector.load %arg11[%c0_131, %c166_132] : memref<1x768xf32, #tpu.memory_space<vmem>>, vector<1x512xf32>
    %c78 = arith.constant 78 : index
    %c0_133 = arith.constant 0 : index
    %120 = vector.load %arg9[%c78, %c0_133] : memref<88x512xf32, #tpu.memory_space<vmem>>, vector<1x512xf32>
    tpu.vector_store %arg9[%c78, %c0_133], %119 {strides = array<i32>} : memref<88x512xf32, #tpu.memory_space<vmem>>, vector<1x512xf32>,
    %c0_134 = arith.constant 0 : index
    %c168 = arith.constant 168 : index
    %121 = vector.load %arg10[%c0_134, %c168] : memref<8x768xf32, #tpu.memory_space<vmem>>, vector<8x512xf32>
    %c56 = arith.constant 56 : index
    %c0_135 = arith.constant 0 : index
    %122 = vector.load %arg9[%c56, %c0_135] : memref<88x512xf32, #tpu.memory_space<vmem>>, vector<8x512xf32>
    tpu.vector_store %arg9[%c56, %c0_135], %121 {strides = array<i32>} : memref<88x512xf32, #tpu.memory_space<vmem>>, vector<8x512xf32>,
    %c0_136 = arith.constant 0 : index
    %c168_137 = arith.constant 168 : index
    %123 = vector.load %arg11[%c0_136, %c168_137] : memref<1x768xf32, #tpu.memory_space<vmem>>, vector<1x512xf32>
    %c79 = arith.constant 79 : index
    %c0_138 = arith.constant 0 : index
    %124 = vector.load %arg9[%c79, %c0_138] : memref<88x512xf32, #tpu.memory_space<vmem>>, vector<1x512xf32>
    tpu.vector_store %arg9[%c79, %c0_138], %123 {strides = array<i32>} : memref<88x512xf32, #tpu.memory_space<vmem>>, vector<1x512xf32>,
    %c0_139 = arith.constant 0 : index
    %c170 = arith.constant 170 : index
    %125 = vector.load %arg10[%c0_139, %c170] : memref<8x768xf32, #tpu.memory_space<vmem>>, vector<8x512xf32>
    %c64 = arith.constant 64 : index
    %c0_140 = arith.constant 0 : index
    %126 = vector.load %arg9[%c64, %c0_140] : memref<88x512xf32, #tpu.memory_space<vmem>>, vector<8x512xf32>
    tpu.vector_store %arg9[%c64, %c0_140], %125 {strides = array<i32>} : memref<88x512xf32, #tpu.memory_space<vmem>>, vector<8x512xf32>,
    %c0_141 = arith.constant 0 : index
    %c170_142 = arith.constant 170 : index
    %127 = vector.load %arg11[%c0_141, %c170_142] : memref<1x768xf32, #tpu.memory_space<vmem>>, vector<1x512xf32>
    %c80 = arith.constant 80 : index
    %c0_143 = arith.constant 0 : index
    %128 = vector.load %arg9[%c80, %c0_143] : memref<88x512xf32, #tpu.memory_space<vmem>>, vector<1x512xf32>
    tpu.vector_store %arg9[%c80, %c0_143], %127 {strides = array<i32>} : memref<88x512xf32, #tpu.memory_space<vmem>>, vector<1x512xf32>,
    %c0_144 = arith.constant 0 : index
    %c0_145 = arith.constant 0 : index
    %129 = vector.load %arg6[%c0_144, %c0_145] : memref<9x81xf32, #tpu.memory_space<vmem>>, vector<9x81xf32>
    %c0_146 = arith.constant 0 : index
    %c0_147 = arith.constant 0 : index
    %130 = vector.load %arg9[%c0_146, %c0_147] : memref<88x512xf32, #tpu.memory_space<vmem>>, vector<81x512xf32>
    %cst_148 = arith.constant dense<0.000000e+00> : vector<9x512xf32>
    %131 = tpu.matmul %129, %130, %cst_148 {dimension_numbers = #tpu.dot_dimension_numbers<[1], [0], [0], [1], [0, 0, 1, 1], [], []>} : vector<9x81xf32>, vector<81x512xf32>, vector<9x512xf32> -> vector<9x512xf32>
    %c0_149 = arith.constant 0 : index
    %c0_150 = arith.constant 0 : index
    %132 = vector.load %arg7[%c0_149, %c0_150] : memref<9x1xf32, #tpu.memory_space<vmem>>, vector<9x1xf32>
    %133 = vector.broadcast %132 : vector<9x1xf32> to vector<9x512xf32>
    %134 = arith.addf %131, %133 : vector<9x512xf32>
    %cst_151 = arith.constant 0.000000e+00 : f32
    %135 = vector.broadcast %cst_151 : f32 to vector<9x512xf32>
    %136 = arith.maximumf %134, %135 : vector<9x512xf32>
    %137 = vector.extract_strided_slice %136 {offsets = [0, 0], sizes = [8, 512], strides = [1, 1]} : vector<9x512xf32> to vector<8x512xf32>
    %138 = vector.extract_strided_slice %136 {offsets = [8, 0], sizes = [1, 512], strides = [1, 1]} : vector<9x512xf32> to vector<1x512xf32>
    %cst_152 = arith.constant 1.000000e+00 : f32
    %139 = vector.broadcast %cst_152 : f32 to vector<1x512xf32>
    %140 = arith.maximumf %138, %139 : vector<1x512xf32>
    %141 = tpu.reciprocal %140 {approx = true} : vector<1x512xf32> -> vector<1x512xf32>
    %142 = arith.mulf %140, %141 : vector<1x512xf32>
    %cst_153 = arith.constant 2.000000e+00 : f32
    %143 = vector.broadcast %cst_153 : f32 to vector<1x512xf32>
    %144 = arith.subf %143, %142 : vector<1x512xf32>
    %145 = arith.mulf %141, %144 : vector<1x512xf32>
    %cst_154 = arith.constant 0.000000e+00 : f32
    %146 = vector.broadcast %cst_154 : f32 to vector<1x512xf32>
    %147 = arith.cmpf ogt, %138, %146 : vector<1x512xf32>
    %cst_155 = arith.constant 0.000000e+00 : f32
    %148 = vector.broadcast %cst_155 : f32 to vector<1x512xf32>
    %149 = arith.select %147, %145, %148 : vector<1x512xi1>, vector<1x512xf32>
    %150 = arith.mulf %149, %0 : vector<1x512xf32>
    %151 = vector.broadcast %150 : vector<1x512xf32> to vector<8x512xf32>
    %152 = arith.mulf %137, %151 : vector<8x512xf32>
    %c0_156 = arith.constant 0 : index
    %c0_157 = arith.constant 0 : index
    %c0_158 = arith.constant 0 : index
    %153 = vector.load %arg8[%c0_156, %c0_157, %c0_158] : memref<1x8x512xf32, #tpu.memory_space<vmem>>, vector<1x8x512xf32>
    %154 = vector.shape_cast %153 : vector<1x8x512xf32> to vector<8x512xf32>
    %155 = vector.shape_cast %152 : vector<8x512xf32> to vector<1x8x512xf32>
    tpu.vector_store %arg8[%c0_156, %c0_157, %c0_158], %155 {strides = array<i32>} : memref<1x8x512xf32, #tpu.memory_space<vmem>>, vector<1x8x512xf32>,
    return
  }
  func.func @transform_0(%arg0: i32) -> (i32, i32, i32) {
    %c0_i32 = arith.constant 0 : i32
    %c0_i32_0 = arith.constant 0 : i32
    %c0_i32_1 = arith.constant 0 : i32
    return %arg0, %c0_i32, %c0_i32_0 : i32, i32, i32
  }
  func.func @transform_1(%arg0: i32) -> (i32, i32, i32) {
    %c0_i32 = arith.constant 0 : i32
    %c0_i32_0 = arith.constant 0 : i32
    %c0_i32_1 = arith.constant 0 : i32
    return %arg0, %c0_i32, %c0_i32_0 : i32, i32, i32
  }
  func.func @transform_2(%arg0: i32) -> (i32, i32) {
    %c0_i32 = arith.constant 0 : i32
    %c0_i32_0 = arith.constant 0 : i32
    %c0_i32_1 = arith.constant 0 : i32
    return %c0_i32, %c0_i32_0 : i32, i32
  }
  func.func @transform_3(%arg0: i32) -> (i32, i32) {
    %c0_i32 = arith.constant 0 : i32
    %c0_i32_0 = arith.constant 0 : i32
    %c0_i32_1 = arith.constant 0 : i32
    return %c0_i32, %c0_i32_0 : i32, i32
  }
  func.func @transform_4(%arg0: i32) -> (i32, i32) {
    %c0_i32 = arith.constant 0 : i32
    %c0_i32_0 = arith.constant 0 : i32
    %c0_i32_1 = arith.constant 0 : i32
    return %c0_i32, %c0_i32_0 : i32, i32
  }
  func.func @transform_5(%arg0: i32) -> (i32, i32) {
    %c0_i32 = arith.constant 0 : i32
    %c0_i32_0 = arith.constant 0 : i32
    %c0_i32_1 = arith.constant 0 : i32
    return %c0_i32, %c0_i32_0 : i32, i32
  }
  func.func @transform_6(%arg0: i32) -> (i32, i32) {
    %c0_i32 = arith.constant 0 : i32
    %c0_i32_0 = arith.constant 0 : i32
    %c0_i32_1 = arith.constant 0 : i32
    return %c0_i32, %c0_i32_0 : i32, i32
  }
  func.func @transform_7(%arg0: i32) -> (i32, i32, i32) {
    %c0_i32 = arith.constant 0 : i32
    %c0_i32_0 = arith.constant 0 : i32
    %c0_i32_1 = arith.constant 0 : i32
    return %arg0, %c0_i32, %c0_i32_0 : i32, i32, i32
  }
}

</mosaic_0001>

<llo_original>
// kernel: tpu_custom_call.1
$region0: #{tpu_custom_call.1}
  #allocation0 [shape = 'u32[]', space=smem, size = 0x4, offset = 0x4, fixed_abs, tag = 'smem constant byte address 0x4 - core index']
  #allocation1 [shape = 'u32[144,128]{1,0:T(1,128)}', space=vmem, size = 0x12000, scoped, tag = 'internal scratch']
  #allocation2 [shape = 'f32[88,512]{1,0:T(8,128)}', space=vmem, size = 0x2c000, scoped, tag = 'scratch operand']
  #allocation3 [shape = 'f32[8,768]{1,0:T(8,128)}', space=vmem, size = 0x6000, scoped, tag = 'scratch operand']
  #allocation4 [shape = 'f32[1,768]{1,0:T(1,128)}', space=vmem, size = 0xc00, scoped, tag = 'scratch operand']
  %s0 = inlined_call_operand.hbm [shape: f32[2,4,768], index: 0, kind: input, shape index: {}]
  %s1 = inlined_call_operand.hbm [shape: f32[2,1,768], index: 1, kind: input, shape index: {}]
  %s2 = inlined_call_operand.vmem [shape: f32[1,512], index: 2, kind: input, shape index: {}]
  %s3 = inlined_call_operand.vmem [shape: f32[9,45], index: 3, kind: input, shape index: {}]
  %s4 = inlined_call_operand.vmem [shape: f32[9,1], index: 4, kind: input, shape index: {}]
  %s5 = inlined_call_operand.vmem [shape: f32[9,81], index: 5, kind: input, shape index: {}]
  %s6 = inlined_call_operand.vmem [shape: f32[9,1], index: 6, kind: input, shape index: {}]
  %s7 = inlined_call_operand.hbm [shape: f32[2,8,512], index: 7, kind: output, shape index: {}]
  %s8 = sld [smem:[#allocation0]]
  $region69: #{tpu_custom_call.1} parent=0
    _
  %s10 = ssub.s32 1, %s8
  %s11 = scalar_select 0, %s10, %s8
  $region1: #{tpu_custom_call.1} parent=0
    #allocation5 [shape = 'u8[24576]{0}', space=vmem, size = 0x6000, scoped, tag = 'input window, operand 0']
    #allocation6 [shape = 's32[2]{0}', space=sflag, size = 0x8, scoped, tag = 'scoped memory for tpu_custom_call.1']
    #allocation7 [shape = 's32[2]{0}', space=sflag, size = 0x8, scoped, tag = 'scoped memory for tpu_custom_call.1']
    #allocation8 [shape = 'u8[6144]{0}', space=vmem, size = 0x1800, scoped, tag = 'input window, operand 1']
    #allocation9 [shape = 's32[2]{0}', space=sflag, size = 0x8, scoped, tag = 'scoped memory for tpu_custom_call.1']
    #allocation10 [shape = 'u8[32768]{0}', space=vmem, size = 0x8000, scoped, tag = 'output window, operand 0']
    %12 = vsyncpa [#allocation6], 0
    %s13 = scalar_lea.sflag [#allocation6], 1
    %14 = vsyncpa %s13, 0
    %15 = vsyncpa [#allocation9], 0
    %s16 = scalar_lea.sflag [#allocation9], 1
    %17 = vsyncpa %s16, 0
    %18 = vsyncpa [#allocation7], 0
    %s19 = scalar_lea.sflag [#allocation7], 1
    %20 = vsyncpa %s19, 0
    loop: start=0, step=1, limit=4
    $region2: #{tpu_custom_call.1} parent=1 // loop_pre_header
      _
    $region3: #{tpu_custom_call.1} parent=1 // loop_header
      %s22 = sphi 0, %s26
      %p23 = scmp.ge.s32.totalorder %s22, 4
      %s32 = sphi 0, %s34
      %s35 = sphi 0, %s32
      %s36 = sphi 0, %s35
      %s52 = sphi 0, %s36
      %s58 = sphi 0, %s60
      %s61 = sphi 0, %s58
      %s62 = sphi 0, %s61
      %s78 = sphi 0, %s62
      %s82 = sphi 0, %s82
      %s84 = sphi 0, %s82
      %s85 = sphi 0, %s84
      %s99 = sphi 0, %s85
      %s103 = sphi 0, %s103
      %s105 = sphi 0, %s103
      %s106 = sphi 0, %s105
      %s120 = sphi 0, %s106
      %s124 = sphi 0, %s124
      %s126 = sphi 0, %s124
      %s127 = sphi 0, %s126
      %s141 = sphi 0, %s127
      %s145 = sphi 0, %s145
      %s147 = sphi 0, %s145
      %s148 = sphi 0, %s147
      %s162 = sphi 0, %s148
      %s166 = sphi 0, %s166
      %s168 = sphi 0, %s166
      %s169 = sphi 0, %s168
      %s183 = sphi 0, %s169
      %s189 = sphi 0, %s191
      %s192 = sphi 0, %s189
      %s193 = sphi 0, %s192
      %s209 = sphi 0, %s193
    $region4: #{tpu_custom_call.1} parent=1 // loop_header_branch
      %25 = sbr.rel (%p23) target = $region8
    $region5: #{tpu_custom_call.1} parent=1 // loop_body
      %s27 = ssub.s32 %s22, 1
      %s28 = ssub.s32 %s22, 2
      %s29 = sadd.s32 %s22, 1
      %s30 = ssub.s32 %s22, %s29
      %p31 = scmp.eq.s32.totalorder %s30, 0
      %s33 = sadd.s32 %s32, 1
      %s34 = scalar_select %p31, %s32, %s33
      %p37 = pneg %p31
      %p38 = scmp.eq.s32.totalorder %s22, 1
      %p39 = por %p37, %p38
      %p40 = scmp.ne.s32.totalorder %s32, %s35
      %p41 = scmp.eq.s32.totalorder %s22, 0
      %p42 = por %p40, %p41
      %p43 = scmp.ne.s32.totalorder %s32, %s35
      %p44 = scmp.eq.s32.totalorder %s27, 1
      %p45 = por %p43, %p44
      %p46 = scmp.ne.s32.totalorder %s35, %s36
      %p47 = scmp.eq.s32.totalorder %s27, 0
      %p48 = por %p46, %p47
      %p49 = scmp.ne.s32.totalorder %s35, %s36
      %p50 = scmp.eq.s32.totalorder %s28, 1
      %p51 = por %p49, %p50
      %p53 = scmp.ne.s32.totalorder %s36, %s52
      %p54 = scmp.eq.s32.totalorder %s28, 0
      %p55 = por %p53, %p54
      %s56 = ssub.s32 %s22, %s29
      %p57 = scmp.eq.s32.totalorder %s56, 0
      %s59 = sadd.s32 %s58, 1
      %s60 = scalar_select %p57, %s58, %s59
      %p63 = pneg %p57
      %p64 = scmp.eq.s32.totalorder %s22, 1
      %p65 = por %p63, %p64
      %p66 = scmp.ne.s32.totalorder %s58, %s61
      %p67 = scmp.eq.s32.totalorder %s22, 0
      %p68 = por %p66, %p67
      %p69 = scmp.ne.s32.totalorder %s58, %s61
      %p70 = scmp.eq.s32.totalorder %s27, 1
      %p71 = por %p69, %p70
      %p72 = scmp.ne.s32.totalorder %s61, %s62
      %p73 = scmp.eq.s32.totalorder %s27, 0
      %p74 = por %p72, %p73
      %p75 = scmp.ne.s32.totalorder %s61, %s62
      %p76 = scmp.eq.s32.totalorder %s28, 1
      %p77 = por %p75, %p76
      %p79 = scmp.ne.s32.totalorder %s62, %s78
      %p80 = scmp.eq.s32.totalorder %s28, 0
      %p81 = por %p79, %p80
      %s83 = sadd.s32 %s82, 1
      %p86 = scmp.eq.s32.totalorder %s22, 1
      %p87 = scmp.ne.s32.totalorder %s82, %s84
      %p88 = scmp.eq.s32.totalorder %s22, 0
      %p89 = por %p87, %p88
      %p90 = scmp.ne.s32.totalorder %s82, %s84
      %p91 = scmp.eq.s32.totalorder %s27, 1
      %p92 = por %p90, %p91
      %p93 = scmp.ne.s32.totalorder %s84, %s85
      %p94 = scmp.eq.s32.totalorder %s27, 0
      %p95 = por %p93, %p94
      %p96 = scmp.ne.s32.totalorder %s84, %s85
      %p97 = scmp.eq.s32.totalorder %s28, 1
      %p98 = por %p96, %p97
      %p100 = scmp.ne.s32.totalorder %s85, %s99
      %p101 = scmp.eq.s32.totalorder %s28, 0
      %p102 = por %p100, %p101
      %s104 = sadd.s32 %s103, 1
      %p107 = scmp.eq.s32.totalorder %s22, 1
      %p108 = scmp.ne.s32.totalorder %s103, %s105
      %p109 = scmp.eq.s32.totalorder %s22, 0
      %p110 = por %p108, %p109
      %p111 = scmp.ne.s32.totalorder %s103, %s105
      %p112 = scmp.eq.s32.totalorder %s27, 1
      %p113 = por %p111, %p112
      %p114 = scmp.ne.s32.totalorder %s105, %s106
      %p115 = scmp.eq.s32.totalorder %s27, 0
      %p116 = por %p114, %p115
      %p117 = scmp.ne.s32.totalorder %s105, %s106
      %p118 = scmp.eq.s32.totalorder %s28, 1
      %p119 = por %p117, %p118
      %p121 = scmp.ne.s32.totalorder %s106, %s120
      %p122 = scmp.eq.s32.totalorder %s28, 0
      %p123 = por %p121, %p122
      %s125 = sadd.s32 %s124, 1
      %p128 = scmp.eq.s32.totalorder %s22, 1
      %p129 = scmp.ne.s32.totalorder %s124, %s126
      %p130 = scmp.eq.s32.totalorder %s22, 0
      %p131 = por %p129, %p130
      %p132 = scmp.ne.s32.totalorder %s124, %s126
      %p133 = scmp.eq.s32.totalorder %s27, 1
      %p134 = por %p132, %p133
      %p135 = scmp.ne.s32.totalorder %s126, %s127
      %p136 = scmp.eq.s32.totalorder %s27, 0
      %p137 = por %p135, %p136
      %p138 = scmp.ne.s32.totalorder %s126, %s127
      %p139 = scmp.eq.s32.totalorder %s28, 1
      %p140 = por %p138, %p139
      %p142 = scmp.ne.s32.totalorder %s127, %s141
      %p143 = scmp.eq.s32.totalorder %s28, 0
      %p144 = por %p142, %p143
      %s146 = sadd.s32 %s145, 1
      %p149 = scmp.eq.s32.totalorder %s22, 1
      %p150 = scmp.ne.s32.totalorder %s145, %s147
      %p151 = scmp.eq.s32.totalorder %s22, 0
      %p152 = por %p150, %p151
      %p153 = scmp.ne.s32.totalorder %s145, %s147
      %p154 = scmp.eq.s32.totalorder %s27, 1
      %p155 = por %p153, %p154
      %p156 = scmp.ne.s32.totalorder %s147, %s148
      %p157 = scmp.eq.s32.totalorder %s27, 0
      %p158 = por %p156, %p157
      %p159 = scmp.ne.s32.totalorder %s147, %s148
      %p160 = scmp.eq.s32.totalorder %s28, 1
      %p161 = por %p159, %p160
      %p163 = scmp.ne.s32.totalorder %s148, %s162
      %p164 = scmp.eq.s32.totalorder %s28, 0
      %p165 = por %p163, %p164
      %s167 = sadd.s32 %s166, 1
      %p170 = scmp.eq.s32.totalorder %s22, 1
      %p171 = scmp.ne.s32.totalorder %s166, %s168
      %p172 = scmp.eq.s32.totalorder %s22, 0
      %p173 = por %p171, %p172
      %p174 = scmp.ne.s32.totalorder %s166, %s168
      %p175 = scmp.eq.s32.totalorder %s27, 1
      %p176 = por %p174, %p175
      %p177 = scmp.ne.s32.totalorder %s168, %s169
      %p178 = scmp.eq.s32.totalorder %s27, 0
      %p179 = por %p177, %p178
      %p180 = scmp.ne.s32.totalorder %s168, %s169
      %p181 = scmp.eq.s32.totalorder %s28, 1
      %p182 = por %p180, %p181
      %p184 = scmp.ne.s32.totalorder %s169, %s183
      %p185 = scmp.eq.s32.totalorder %s28, 0
      %p186 = por %p184, %p185
      %s187 = ssub.s32 %s22, %s29
      %p188 = scmp.eq.s32.totalorder %s187, 0
      %s190 = sadd.s32 %s189, 1
      %s191 = scalar_select %p188, %s189, %s190
      %p194 = pneg %p188
      %p195 = scmp.eq.s32.totalorder %s22, 1
      %p196 = por %p194, %p195
      %p197 = scmp.ne.s32.totalorder %s189, %s192
      %p198 = scmp.eq.s32.totalorder %s22, 0
      %p199 = por %p197, %p198
      %p200 = scmp.ne.s32.totalorder %s189, %s192
      %p201 = scmp.eq.s32.totalorder %s27, 1
      %p202 = por %p200, %p201
      %p203 = scmp.ne.s32.totalorder %s192, %s193
      %p204 = scmp.eq.s32.totalorder %s27, 0
      %p205 = por %p203, %p204
      %p206 = scmp.ne.s32.totalorder %s192, %s193
      %p207 = scmp.eq.s32.totalorder %s28, 1
      %p208 = por %p206, %p207
      %p210 = scmp.ne.s32.totalorder %s193, %s209
      %p211 = scmp.eq.s32.totalorder %s28, 0
      %p212 = por %p210, %p211
      %p213 = scmp.le.s32.totalorder 1, %s22
      %p214 = scmp.lt.s32.totalorder %s22, 3
      %p215 = pnand %p213, %p214
      %p216 = pneg %p215
      // Predicated region
      $region9: #{tpu_custom_call.1} parent=5 // pred_check
        _
      $region10: #{tpu_custom_call.1} parent=5 // pred_check_branch
        %218 = sbr.rel (%p215) target = $region12
      $region11: #{tpu_custom_call.1} parent=5 // pred_region
        %s219 = ssub.s32 %s22, 1
        // Predicated region
        $region13: #{tpu_custom_call.1} parent=11 // pred_check
          %p220 = pneg %p95
        $region14: #{tpu_custom_call.1} parent=11 // pred_check_branch
          %222 = sbr.rel (%p220) target = $region16
        $region15: #{tpu_custom_call.1} parent=11 // pred_region
          _
        $region16: #{tpu_custom_call.1} parent=11 // pred_fallthru
          _
        // Predicated region
        $region17: #{tpu_custom_call.1} parent=11 // pred_check
          %p223 = pneg %p116
        $region18: #{tpu_custom_call.1} parent=11 // pred_check_branch
          %225 = sbr.rel (%p223) target = $region20
        $region19: #{tpu_custom_call.1} parent=11 // pred_region
          _
        $region20: #{tpu_custom_call.1} parent=11 // pred_fallthru
          _
        // Predicated region
        $region21: #{tpu_custom_call.1} parent=11 // pred_check
          %p226 = pneg %p137
        $region22: #{tpu_custom_call.1} parent=11 // pred_check_branch
          %228 = sbr.rel (%p226) target = $region24
        $region23: #{tpu_custom_call.1} parent=11 // pred_region
          _
        $region24: #{tpu_custom_call.1} parent=11 // pred_fallthru
          _
        // Predicated region
        $region25: #{tpu_custom_call.1} parent=11 // pred_check
          %p229 = pneg %p158
        $region26: #{tpu_custom_call.1} parent=11 // pred_check_branch
          %231 = sbr.rel (%p229) target = $region28
        $region27: #{tpu_custom_call.1} parent=11 // pred_region
          _
        $region28: #{tpu_custom_call.1} parent=11 // pred_fallthru
          _
        // Predicated region
        $region29: #{tpu_custom_call.1} parent=11 // pred_check
          %p232 = pneg %p179
        $region30: #{tpu_custom_call.1} parent=11 // pred_check_branch
          %234 = sbr.rel (%p232) target = $region32
        $region31: #{tpu_custom_call.1} parent=11 // pred_region
          _
        $region32: #{tpu_custom_call.1} parent=11 // pred_fallthru
          _
      $region12: #{tpu_custom_call.1} parent=5 // pred_fallthru
        _
      %p235 = scmp.lt.s32.totalorder %s22, 2
      // Predicated region
      $region33: #{tpu_custom_call.1} parent=5 // pred_check
        %p236 = pneg %p235
      $region34: #{tpu_custom_call.1} parent=5 // pred_check_branch
        %238 = sbr.rel (%p236) target = $region36
      $region35: #{tpu_custom_call.1} parent=5 // pred_region
        // Predicated region
        $region37: #{tpu_custom_call.1} parent=35 // pred_check
          %p239 = pneg %p42
        $region38: #{tpu_custom_call.1} parent=35 // pred_check_branch
          %241 = sbr.rel (%p239) target = $region40
        $region39: #{tpu_custom_call.1} parent=35 // pred_region
          %s242 = sand.u32 %s32, 1
          %s243 = scalar_lea.sflag [#allocation6], %s242
          %s244 = sand.u32 %s32, 1
          %s245 = smul.addr %s244, 24
          %s246 = scalar_lea.vmem [#allocation5], %s245
          %s248 = ssub.s32 384, 384
          %249 = vsyncadd %s243, %s248
          %s250 = smul.addr %s22, 6
          %s251 = smul.addr %s250, 64
          %s252 = scalar_lea.hbm %s0, %s251
          %s254 = sshll.u32 %s246, 4
          %s255 = int_to_ptr.vmem [resolvable:$true] %s254
          %257 = dma.hbm_to_vmem [thread:$0]  %s252, 384, %s255, %s243
        $region40: #{tpu_custom_call.1} parent=35 // pred_fallthru
          _
        // Predicated region
        $region41: #{tpu_custom_call.1} parent=35 // pred_check
          %p258 = pneg %p68
        $region42: #{tpu_custom_call.1} parent=35 // pred_check_branch
          %260 = sbr.rel (%p258) target = $region44
        $region43: #{tpu_custom_call.1} parent=35 // pred_region
          %s261 = sand.u32 %s58, 1
          %s262 = scalar_lea.sflag [#allocation9], %s261
          %s263 = sand.u32 %s58, 1
          %s264 = smul.addr %s263, 6
          %s265 = scalar_lea.vmem [#allocation8], %s264
          %s267 = ssub.s32 96, 96
          %268 = vsyncadd %s262, %s267
          %s269 = smul.addr %s22, 6
          %s270 = smul.addr %s269, 16
          %s271 = scalar_lea.hbm %s1, %s270
          %s273 = sshll.u32 %s265, 4
          %s274 = int_to_ptr.vmem [resolvable:$true] %s273
          %276 = dma.hbm_to_vmem [thread:$0]  %s271, 96, %s274, %s262
        $region44: #{tpu_custom_call.1} parent=35 // pred_fallthru
          _
      $region36: #{tpu_custom_call.1} parent=5 // pred_fallthru
        _
      %p277 = scmp.le.s32.totalorder 1, %s22
      %p278 = scmp.lt.s32.totalorder %s22, 3
      %p279 = pnand %p277, %p278
      %p280 = pneg %p279
      // Predicated region
      $region45: #{tpu_custom_call.1} parent=5 // pred_check
        _
      $region46: #{tpu_custom_call.1} parent=5 // pred_check_branch
        %282 = sbr.rel (%p279) target = $region48
      $region47: #{tpu_custom_call.1} parent=5 // pred_region
        %s283 = ssub.s32 %s22, 1
        %s284 = sand.u32 %s35, 1
        %s285 = scalar_lea.sflag [#allocation6], %s284
        %s286 = sand.u32 %s35, 1
        %s287 = smul.addr %s286, 24
        %s288 = scalar_lea.vmem [#allocation5], %s287
        // Predicated region
        $region49: #{tpu_custom_call.1} parent=47 // pred_check
          %p289 = pneg %p48
        $region50: #{tpu_custom_call.1} parent=47 // pred_check_branch
          %291 = sbr.rel (%p289) target = $region52
        $region51: #{tpu_custom_call.1} parent=47 // pred_region
          %292 = dma.done %s285, 384
        $region52: #{tpu_custom_call.1} parent=47 // pred_fallthru
          _
        %s293 = sand.u32 %s61, 1
        %s294 = scalar_lea.sflag [#allocation9], %s293
        %s295 = sand.u32 %s61, 1
        %s296 = smul.addr %s295, 6
        %s297 = scalar_lea.vmem [#allocation8], %s296
        // Predicated region
        $region53: #{tpu_custom_call.1} parent=47 // pred_check
          %p298 = pneg %p74
        $region54: #{tpu_custom_call.1} parent=47 // pred_check_branch
          %300 = sbr.rel (%p298) target = $region56
        $region55: #{tpu_custom_call.1} parent=47 // pred_region
          %301 = dma.done %s294, 96
        $region56: #{tpu_custom_call.1} parent=47 // pred_fallthru
          _
        %s302 = sand.u32 %s35, 1
        %s303 = scalar_lea.sflag [#allocation6], %s302
        %s304 = sand.u32 %s35, 1
        %s305 = smul.addr %s304, 24
        %s306 = scalar_lea.vmem [#allocation5], %s305
        %p307 = pneg %p48
        %p308 = pneg %p45
        %s309 = sand.u32 %s61, 1
        %s310 = scalar_lea.sflag [#allocation9], %s309
        %s311 = sand.u32 %s61, 1
        %s312 = smul.addr %s311, 6
        %s313 = scalar_lea.vmem [#allocation8], %s312
        %p314 = pneg %p74
        %p315 = pneg %p71
        %p316 = pneg %p95
        %p317 = pneg %p92
        %p318 = pneg %p116
        %p319 = pneg %p113
        %p320 = pneg %p137
        %p321 = pneg %p134
        %p322 = pneg %p158
        %p323 = pneg %p155
        %p324 = pneg %p179
        %p325 = pneg %p176
        %p326 = pneg %p205
        %p327 = pneg %p202
        %s328 = sand.u32 %s192, 1
        %s329 = scalar_lea.sflag [#allocation7], %s328
        %s330 = sand.u32 %s192, 1
        %s331 = smul.addr %s330, 32
        %s332 = scalar_lea.vmem [#allocation10], %s331
        %v333 = vld [vmem:[%s2] sm:$0xf]
        %334 = vst [vmem:[#allocation3] sm:$0xff] 0.0
        %335 = vst [vmem:[#allocation3 + $0x28] sm:$0xff] 0.0
        %v336 = vlaneseq
        %vm337 = vcmp.ge.s32.totalorder %v336, 0
        %vm338 = vcmp.lt.s32.totalorder %v336, 128
        %vm339 = vmand %vm337, %vm338
        %340 = vst.msk [vmem:[#allocation4] sm:$0x1] %vm339, 0.0
        %341 = vst.msk [vmem:[#allocation4 + $0x5] sm:$0x1] %vm339, 0.0
        %v342 = vld [vmem:[%s288] sm:$0xff]
        %v343 = vld [vmem:[%s288 + $0x8] sm:$0xff]
        %v344 = vld [vmem:[%s288 + $0x10] sm:$0xf]
        %v348 = vcombine.high %v342, %v342
        %v349 = vcombine.high %v343, %v343
        %350 = vrot.lane.b32.xlu0 %v342, 21
        %v351 = vpop.permute.xlu0 %350
        %352 = vrot.lane.b32.xlu0 %v348, 21
        %v353 = vpop.permute.xlu0 %352
        %354 = vrot.lane.b32.xlu0 %v343, 21
        %v355 = vpop.permute.xlu0 %354
        %356 = vrot.lane.b32.xlu0 %v349, 21
        %v357 = vpop.permute.xlu0 %356
        %358 = vrot.lane.b32.xlu0 %v344, 21
        %v359 = vpop.permute.xlu0 %358
        %vm360 = vcmask 171008
        %v361 = vsel %vm360, %v351, %v353
        %v362 = vsel %vm360, %v353, %v355
        %v363 = vsel %vm360, %v355, %v357
        %v364 = vsel %vm360, %v357, %v359
        %369 = vst [vmem:[#allocation2] sm:$0xf] %v361
        %370 = vst [vmem:[#allocation2 + $0x8] sm:$0xf] %v362
        %371 = vst [vmem:[#allocation2 + $0x10] sm:$0xf] %v363
        %372 = vst [vmem:[#allocation2 + $0x18] sm:$0xf] %v364
        %v373 = vld [vmem:[%s297] sm:$0x1f]
        %375 = vrot.lane.b32.xlu0 %v373, 21
        %v376 = vpop.permute.xlu0 %375
        %v377 = vrot.slane %v376, 1
        %v378 = vsel %vm360, %v376, %v377
        %vm380 = vcmp.lt.s32.totalorder %v336, 512
        %vm381 = vmand %vm337, %vm380
        %s382 = scalar_lea.vmem [#allocation2], 132
        %383 = vst.msk [vmem:[%s382] ss:$8 sm:$0xf] %vm381, %v378
        %384 = vst.msk [vmem:[%s382] ss:$8 sm:$0x0] %vm381, %v378
        %v385 = vld [vmem:[%s288] sm:$0xff]
        %v386 = vld [vmem:[%s288 + $0x8] sm:$0xff]
        %v387 = vld [vmem:[%s288 + $0x10] sm:$0xf]
        %v391 = vcombine.low %v385, %v385
        %v392 = vcombine.low %v386, %v386
        %v393 = vcombine.low %v387, %v387
        %394 = vrot.lane.b32.xlu0 %v391, 20
        %v395 = vpop.permute.xlu0 %394
        %396 = vrot.lane.b32.xlu0 %v385, 20
        %v397 = vpop.permute.xlu0 %396
        %398 = vrot.lane.b32.xlu0 %v392, 20
        %v399 = vpop.permute.xlu0 %398
        %400 = vrot.lane.b32.xlu0 %v386, 20
        %v401 = vpop.permute.xlu0 %400
        %402 = vrot.lane.b32.xlu0 %v393, 20
        %v403 = vpop.permute.xlu0 %402
        %vm404 = vcmask 162816
        %v405 = vsel %vm404, %v395, %v397
        %v406 = vsel %vm404, %v397, %v399
        %v407 = vsel %vm404, %v399, %v401
        %v408 = vsel %vm404, %v401, %v403
        %413 = vst [vmem:[#allocation2] sm:$0xf0] %v405
        %414 = vst [vmem:[#allocation2 + $0x8] sm:$0xf0] %v406
        %415 = vst [vmem:[#allocation2 + $0x10] sm:$0xf0] %v407
        %416 = vst [vmem:[#allocation2 + $0x18] sm:$0xf0] %v408
        %v417 = vld [vmem:[%s297] sm:$0x1f]
        %419 = vrot.lane.b32.xlu0 %v417, 20
        %v420 = vpop.permute.xlu0 %419
        %v421 = vrot.slane %v420, 1
        %v422 = vsel %vm404, %v420, %v421
        %s424 = scalar_lea.vmem [#allocation2], 133
        %425 = vst.msk [vmem:[%s424] ss:$8 sm:$0xf] %vm381, %v422
        %426 = vst.msk [vmem:[%s424] ss:$8 sm:$0x0] %vm381, %v422
        %v427 = vld [vmem:[%s288] sm:$0xff]
        %v428 = vld [vmem:[%s288 + $0x8] sm:$0xff]
        %v429 = vld [vmem:[%s288 + $0x10] sm:$0xf]
        %v433 = vcombine.high %v427, %v427
        %v434 = vcombine.high %v428, %v428
        %435 = vrot.lane.b32.xlu0 %v427, 19
        %v436 = vpop.permute.xlu0 %435
        %437 = vrot.lane.b32.xlu0 %v433, 19
        %v438 = vpop.permute.xlu0 %437
        %439 = vrot.lane.b32.xlu0 %v428, 19
        %v440 = vpop.permute.xlu0 %439
        %441 = vrot.lane.b32.xlu0 %v434, 19
        %v442 = vpop.permute.xlu0 %441
        %443 = vrot.lane.b32.xlu0 %v429, 19
        %v444 = vpop.permute.xlu0 %443
        %vm445 = vcmask 154624
        %v446 = vsel %vm445, %v436, %v438
        %v447 = vsel %vm445, %v438, %v440
        %v448 = vsel %vm445, %v440, %v442
        %v449 = vsel %vm445, %v442, %v444
        %454 = vst [vmem:[#allocation2 + $0x20] sm:$0xf] %v446
        %455 = vst [vmem:[#allocation2 + $0x28] sm:$0xf] %v447
        %456 = vst [vmem:[#allocation2 + $0x30] sm:$0xf] %v448
        %457 = vst [vmem:[#allocation2 + $0x38] sm:$0xf] %v449
        %v458 = vld [vmem:[%s297] sm:$0x1f]
        %460 = vrot.lane.b32.xlu0 %v458, 19
        %v461 = vpop.permute.xlu0 %460
        %v462 = vrot.slane %v461, 1
        %v463 = vsel %vm445, %v461, %v462
        %s465 = scalar_lea.vmem [#allocation2], 134
        %466 = vst.msk [vmem:[%s465] ss:$8 sm:$0xf] %vm381, %v463
        %467 = vst.msk [vmem:[%s465] ss:$8 sm:$0x0] %vm381, %v463
        %v468 = vld [vmem:[%s288] sm:$0xff]
        %v469 = vld [vmem:[%s288 + $0x8] sm:$0xff]
        %v470 = vld [vmem:[%s288 + $0x10] sm:$0xf]
        %v474 = vcombine.low %v468, %v468
        %v475 = vcombine.low %v469, %v469
        %v476 = vcombine.low %v470, %v470
        %477 = vrot.lane.b32.xlu0 %v474, 1
        %v478 = vpop.permute.xlu0 %477
        %479 = vrot.lane.b32.xlu0 %v468, 1
        %v480 = vpop.permute.xlu0 %479
        %481 = vrot.lane.b32.xlu0 %v475, 1
        %v482 = vpop.permute.xlu0 %481
        %483 = vrot.lane.b32.xlu0 %v469, 1
        %v484 = vpop.permute.xlu0 %483
        %485 = vrot.lane.b32.xlu0 %v476, 1
        %v486 = vpop.permute.xlu0 %485
        %vm487 = vcmask 7168
        %v488 = vsel %vm487, %v478, %v480
        %v489 = vsel %vm487, %v480, %v482
        %v490 = vsel %vm487, %v482, %v484
        %v491 = vsel %vm487, %v484, %v486
        %496 = vst [vmem:[#allocation2 + $0x20] sm:$0xf0] %v488
        %497 = vst [vmem:[#allocation2 + $0x28] sm:$0xf0] %v489
        %498 = vst [vmem:[#allocation2 + $0x30] sm:$0xf0] %v490
        %499 = vst [vmem:[#allocation2 + $0x38] sm:$0xf0] %v491
        %v500 = vld [vmem:[%s297] sm:$0x1f]
        %502 = vrot.lane.b32.xlu0 %v500, 1
        %v503 = vpop.permute.xlu0 %502
        %v504 = vrot.slane %v503, 1
        %v505 = vsel %vm487, %v503, %v504
        %s507 = scalar_lea.vmem [#allocation2], 135
        %508 = vst.msk [vmem:[%s507] ss:$8 sm:$0xf] %vm381, %v505
        %509 = vst.msk [vmem:[%s507] ss:$8 sm:$0x0] %vm381, %v505
        %v510 = vld [vmem:[%s288 + $0x4] sm:$0xff]
        %v511 = vld [vmem:[%s288 + $0xc] sm:$0xff]
        %v514 = vcombine.high %v510, %v510
        %v515 = vcombine.high %v511, %v511
        %518 = vst [vmem:[#allocation2 + $0x40] sm:$0xf] %v510
        %519 = vst [vmem:[#allocation2 + $0x48] sm:$0xf] %v514
        %520 = vst [vmem:[#allocation2 + $0x50] sm:$0xf] %v511
        %521 = vst [vmem:[#allocation2 + $0x58] sm:$0xf] %v515
        %v522 = vld [vmem:[%s297 + $0x1] sm:$0xf]
        %s523 = scalar_lea.vmem [#allocation2], 160
        %524 = vst.msk [vmem:[%s523] ss:$8 sm:$0xf] %vm381, %v522
        %525 = vst.msk [vmem:[%s523] ss:$8 sm:$0x0] %vm381, %v522
        %v526 = vld [vmem:[%s288 + $0x4] sm:$0xff]
        %v527 = vld [vmem:[%s288 + $0xc] sm:$0xff]
        %v528 = vld [vmem:[%s288 + $0x14] sm:$0xf]
        %v532 = vcombine.low %v526, %v526
        %v533 = vcombine.low %v527, %v527
        %v534 = vcombine.low %v528, %v528
        %535 = vrot.lane.b32.xlu0 %v532, 127
        %v536 = vpop.permute.xlu0 %535
        %537 = vrot.lane.b32.xlu0 %v526, 127
        %v538 = vpop.permute.xlu0 %537
        %539 = vrot.lane.b32.xlu0 %v533, 127
        %v540 = vpop.permute.xlu0 %539
        %541 = vrot.lane.b32.xlu0 %v527, 127
        %v542 = vpop.permute.xlu0 %541
        %543 = vrot.lane.b32.xlu0 %v534, 127
        %v544 = vpop.permute.xlu0 %543
        %vm545 = vcmask 1039360
        %v546 = vsel %vm545, %v536, %v538
        %v547 = vsel %vm545, %v538, %v540
        %v548 = vsel %vm545, %v540, %v542
        %v549 = vsel %vm545, %v542, %v544
        %554 = vst [vmem:[#allocation2 + $0x40] sm:$0xf0] %v546
        %555 = vst [vmem:[#allocation2 + $0x48] sm:$0xf0] %v547
        %556 = vst [vmem:[#allocation2 + $0x50] sm:$0xf0] %v548
        %557 = vst [vmem:[#allocation2 + $0x58] sm:$0xf0] %v549
        %v558 = vld [vmem:[%s297 + $0x1] sm:$0x1f]
        %560 = vrot.lane.b32.xlu0 %v558, 127
        %v561 = vpop.permute.xlu0 %560
        %v562 = vrot.slane %v561, 1
        %v563 = vsel %vm545, %v561, %v562
        %s565 = scalar_lea.vmem [#allocation2], 161
        %566 = vst.msk [vmem:[%s565] ss:$8 sm:$0xf] %vm381, %v563
        %567 = vst.msk [vmem:[%s565] ss:$8 sm:$0x0] %vm381, %v563
        %v568 = vld [vmem:[%s288 + $0x4] sm:$0xff]
        %v569 = vld [vmem:[%s288 + $0xc] sm:$0xff]
        %v570 = vld [vmem:[%s288 + $0x14] sm:$0xf]
        %v574 = vcombine.high %v568, %v568
        %v575 = vcombine.high %v569, %v569
        %576 = vrot.lane.b32.xlu0 %v568, 109
        %v577 = vpop.permute.xlu0 %576
        %578 = vrot.lane.b32.xlu0 %v574, 109
        %v579 = vpop.permute.xlu0 %578
        %580 = vrot.lane.b32.xlu0 %v569, 109
        %v581 = vpop.permute.xlu0 %580
        %582 = vrot.lane.b32.xlu0 %v575, 109
        %v583 = vpop.permute.xlu0 %582
        %584 = vrot.lane.b32.xlu0 %v570, 109
        %v585 = vpop.permute.xlu0 %584
        %vm586 = vcmask 891904
        %v587 = vsel %vm586, %v577, %v579
        %v588 = vsel %vm586, %v579, %v581
        %v589 = vsel %vm586, %v581, %v583
        %v590 = vsel %vm586, %v583, %v585
        %595 = vst [vmem:[#allocation2 + $0x60] sm:$0xf] %v587
        %596 = vst [vmem:[#allocation2 + $0x68] sm:$0xf] %v588
        %597 = vst [vmem:[#allocation2 + $0x70] sm:$0xf] %v589
        %598 = vst [vmem:[#allocation2 + $0x78] sm:$0xf] %v590
        %v599 = vld [vmem:[%s297 + $0x1] sm:$0x1f]
        %601 = vrot.lane.b32.xlu0 %v599, 109
        %v602 = vpop.permute.xlu0 %601
        %v603 = vrot.slane %v602, 1
        %v604 = vsel %vm586, %v602, %v603
        %s606 = scalar_lea.vmem [#allocation2], 162
        %607 = vst.msk [vmem:[%s606] ss:$8 sm:$0xf] %vm381, %v604
        %608 = vst.msk [vmem:[%s606] ss:$8 sm:$0x0] %vm381, %v604
        %v609 = vld [vmem:[%s288 + $0x4] sm:$0xff]
        %v610 = vld [vmem:[%s288 + $0xc] sm:$0xff]
        %v611 = vld [vmem:[%s288 + $0x14] sm:$0xf]
        %v615 = vcombine.low %v609, %v609
        %v616 = vcombine.low %v610, %v610
        %v617 = vcombine.low %v611, %v611
        %618 = vrot.lane.b32.xlu0 %v615, 108
        %v619 = vpop.permute.xlu0 %618
        %620 = vrot.lane.b32.xlu0 %v609, 108
        %v621 = vpop.permute.xlu0 %620
        %622 = vrot.lane.b32.xlu0 %v616, 108
        %v623 = vpop.permute.xlu0 %622
        %624 = vrot.lane.b32.xlu0 %v610, 108
        %v625 = vpop.permute.xlu0 %624
        %626 = vrot.lane.b32.xlu0 %v617, 108
        %v627 = vpop.permute.xlu0 %626
        %vm628 = vcmask 883712
        %v629 = vsel %vm628, %v619, %v621
        %v630 = vsel %vm628, %v621, %v623
        %v631 = vsel %vm628, %v623, %v625
        %v632 = vsel %vm628, %v625, %v627
        %637 = vst [vmem:[#allocation2 + $0x60] sm:$0xf0] %v629
        %638 = vst [vmem:[#allocation2 + $0x68] sm:$0xf0] %v630
        %639 = vst [vmem:[#allocation2 + $0x70] sm:$0xf0] %v631
        %640 = vst [vmem:[#allocation2 + $0x78] sm:$0xf0] %v632
        %v641 = vld [vmem:[%s297 + $0x1] sm:$0x1f]
        %643 = vrot.lane.b32.xlu0 %v641, 108
        %v644 = vpop.permute.xlu0 %643
        %v645 = vrot.slane %v644, 1
        %v646 = vsel %vm628, %v644, %v645
        %s648 = scalar_lea.vmem [#allocation2], 163
        %649 = vst.msk [vmem:[%s648] ss:$8 sm:$0xf] %vm381, %v646
        %650 = vst.msk [vmem:[%s648] ss:$8 sm:$0x0] %vm381, %v646
        %v651 = vld [vmem:[%s288 + $0x4] sm:$0xff]
        %v652 = vld [vmem:[%s288 + $0xc] sm:$0xff]
        %v653 = vld [vmem:[%s288 + $0x14] sm:$0xf]
        %v657 = vcombine.high %v651, %v651
        %v658 = vcombine.high %v652, %v652
        %659 = vrot.lane.b32.xlu0 %v651, 107
        %v660 = vpop.permute.xlu0 %659
        %661 = vrot.lane.b32.xlu0 %v657, 107
        %v662 = vpop.permute.xlu0 %661
        %663 = vrot.lane.b32.xlu0 %v652, 107
        %v664 = vpop.permute.xlu0 %663
        %665 = vrot.lane.b32.xlu0 %v658, 107
        %v666 = vpop.permute.xlu0 %665
        %667 = vrot.lane.b32.xlu0 %v653, 107
        %v668 = vpop.permute.xlu0 %667
        %vm669 = vcmask 875520
        %v670 = vsel %vm669, %v660, %v662
        %v671 = vsel %vm669, %v662, %v664
        %v672 = vsel %vm669, %v664, %v666
        %v673 = vsel %vm669, %v666, %v668
        %678 = vst [vmem:[#allocation2 + $0x80] sm:$0xf] %v670
        %679 = vst [vmem:[#allocation2 + $0x88] sm:$0xf] %v671
        %680 = vst [vmem:[#allocation2 + $0x90] sm:$0xf] %v672
        %681 = vst [vmem:[#allocation2 + $0x98] sm:$0xf] %v673
        %v682 = vld [vmem:[%s297 + $0x1] sm:$0x1f]
        %684 = vrot.lane.b32.xlu0 %v682, 107
        %v685 = vpop.permute.xlu0 %684
        %v686 = vrot.slane %v685, 1
        %v687 = vsel %vm669, %v685, %v686
        %s689 = scalar_lea.vmem [#allocation2], 164
        %690 = vst.msk [vmem:[%s689] ss:$8 sm:$0xf] %vm381, %v687
        %691 = vst.msk [vmem:[%s689] ss:$8 sm:$0x0] %vm381, %v687
        %v692 = vld [vmem:[%s3] sm:$0xff]
        %v693 = vld [vmem:[%s3 + $0x8] sm:$0x1]
        %v694 = vld [vmem:[#allocation2] sm:$0xff]
        %v695 = vld [vmem:[#allocation2 + $0x8] sm:$0xff]
        %v696 = vld [vmem:[#allocation2 + $0x10] sm:$0xff]
        %v697 = vld [vmem:[#allocation2 + $0x18] sm:$0xff]
        %v698 = vld [vmem:[#allocation2 + $0x20] sm:$0xff]
        %v699 = vld [vmem:[#allocation2 + $0x28] sm:$0xff]
        %v700 = vld [vmem:[#allocation2 + $0x30] sm:$0xff]
        %v701 = vld [vmem:[#allocation2 + $0x38] sm:$0xff]
        %v702 = vld [vmem:[#allocation2 + $0x40] sm:$0xff]
        %v703 = vld [vmem:[#allocation2 + $0x48] sm:$0xff]
        %v704 = vld [vmem:[#allocation2 + $0x50] sm:$0xff]
        %v705 = vld [vmem:[#allocation2 + $0x58] sm:$0xff]
        %v706 = vld [vmem:[#allocation2 + $0x60] sm:$0xff]
        %v707 = vld [vmem:[#allocation2 + $0x68] sm:$0xff]
        %v708 = vld [vmem:[#allocation2 + $0x70] sm:$0xff]
        %v709 = vld [vmem:[#allocation2 + $0x78] sm:$0xff]
        %v710 = vld [vmem:[#allocation2 + $0x80] sm:$0xff]
        %v711 = vld [vmem:[#allocation2 + $0x88] sm:$0xff]
        %v712 = vld [vmem:[#allocation2 + $0x90] sm:$0xff]
        %v713 = vld [vmem:[#allocation2 + $0x98] sm:$0xff]
        %v714 = vld [vmem:[#allocation2 + $0xa0] sm:$0x1f]
        %v715 = vld [vmem:[#allocation2 + $0xa8] sm:$0x1f]
        %v716 = vld [vmem:[#allocation2 + $0xb0] sm:$0x1f]
        %v717 = vld [vmem:[#allocation2 + $0xb8] sm:$0x1f]
        %v718 = vld [vmem:[%s4] sm:$0xff]
        %v719 = vld [vmem:[%s4 + $0x8] sm:$0x1]
        %721 = vset.pattern.permute.xlu0 0
        %722 = vperm.xlu0 %721, %v718
        %v723 = vpop.permute.xlu0 %722
        %726 = vset.pattern.permute.xlu0 0
        %727 = vperm.xlu0 %726, %v719
        %v728 = vpop.permute.xlu0 %727
        %vm730 = vcmask 367616
        %v732 = vsel %vm730, %v692, 0
        %v735 = vsel %vm730, %v693, 0
        %vm737 = vcmask 1044480
        %v739 = vsel %vm737, %v714, 0
        %v742 = vsel %vm737, %v715, 0
        %v745 = vsel %vm737, %v716, 0
        %v748 = vsel %vm737, %v717, 0
        %750 = vmatprep.subr.mxu0 0.0
        %751 = vmatpush1.msra.mxu0 0.0
        %752 = vmatprep.subr.mxu0 0.0
        %753 = vmatpush1.msra.mxu0 0.0
        %754 = vmatprep.subr.mxu0 0.0
        %755 = vmatpush1.msra.mxu0 0.0
        %756 = vmatprep.subr.mxu0 0.0
        %757 = vmatpush1.msra.mxu0 0.0
        %758 = vmatprep.subr.mxu0 0.0
        %759 = vmatpush1.msra.mxu0 0.0
        %760 = vmatprep.subr.mxu0 0.0
        %761 = vmatpush1.msra.mxu0 0.0
        %762 = vmatprep.subr.mxu0 0.0
        %763 = vmatpush1.msra.mxu0 0.0
        %764 = vmatprep.subr.mxu0 0.0
        %765 = vmatpush1.msra.mxu0 0.0
        %766 = vmatprep.subr.mxu0 0.0
        %767 = vmatpush1.msra.mxu0 0.0
        %768 = vmatprep.subr.mxu0 0.0
        %769 = vmatpush1.msra.mxu0 0.0
        %770 = vmatprep.subr.mxu0 %v742
        %771 = vmatpush1.msra.mxu0 %v739
        %772 = vmatprep.subr.mxu0 %v711
        %773 = vmatpush1.msra.mxu0 %v710
        %774 = vmatprep.subr.mxu0 %v707
        %775 = vmatpush1.msra.mxu0 %v706
        %776 = vmatprep.subr.mxu0 %v703
        %777 = vmatpush1.msra.mxu0 %v702
        %778 = vmatprep.subr.mxu0 %v699
        %779 = vmatpush1.msra.mxu0 %v698
        %780 = vmatprep.subr.mxu0 %v695
        %781 = vmatpush1.msra.mxu0 %v694
        %782 = vmatprep.subr.mxu0 0.0
        %783 = vmatpush2.msra.mxu0 0.0
        %784 = vmatprep.subr.mxu0 0.0
        %785 = vmatpush2.msra.mxu0 0.0
        %786 = vmatprep.subr.mxu0 0.0
        %787 = vmatpush2.msra.mxu0 0.0
        %788 = vmatprep.subr.mxu0 0.0
        %789 = vmatpush2.msra.mxu0 0.0
        %790 = vmatprep.subr.mxu0 0.0
        %791 = vmatpush2.msra.mxu0 0.0
        %792 = vmatprep.subr.mxu0 0.0
        %793 = vmatpush2.msra.mxu0 0.0
        %794 = vmatprep.subr.mxu0 0.0
        %795 = vmatpush2.msra.mxu0 0.0
        %796 = vmatprep.subr.mxu0 0.0
        %797 = vmatpush2.msra.mxu0 0.0
        %798 = vmatprep.subr.mxu0 0.0
        %799 = vmatpush2.msra.mxu0 0.0
        %800 = vmatprep.subr.mxu0 0.0
        %801 = vmatpush2.msra.mxu0 0.0
        %802 = vmatprep.subr.mxu0 0.0
        %803 = vmatpush2.msra.mxu0 0.0
        %804 = vmatprep.subr.mxu0 0.0
        %805 = vmatpush2.msra.mxu0 0.0
        %806 = vmatprep.subr.mxu0 0.0
        %807 = vmatpush2.msra.mxu0 0.0
        %808 = vmatprep.subr.mxu0 0.0
        %809 = vmatpush2.msra.mxu0 0.0
        %810 = vmatprep.subr.mxu0 0.0
        %811 = vmatpush2.msra.mxu0 0.0
        %812 = vmatprep.subr.mxu0 0.0
        %813 = vmatpush2.msra.mxu0 0.0
        %814 = vmatprep.mubr.f32.mxu0 0.0
        %815 = vmatmul.mubr.f32.gmra.mxu0 %v732
        %v816 = vpop.f32.mrf.mxu0
        %v817 = vadd.f32 %v723, %v816
        %v818 = vpop.f32.mrf.mxu0
        %v819 = vadd.f32 %v723, %v818
        %820 = vmatprep.mubr.f32.mxu0 0.0
        %821 = vmatmul.mubr.f32.gmra.mxu0 %v735
        %v822 = vpop.f32.mrf.mxu0
        %v823 = vadd.f32 %v728, %v822
        %v824 = vpop.f32.mrf.mxu0
        %v825 = vadd.f32 %v728, %v824
        %826 = vdwg.mxu0
        %827 = vmatprep.subr.mxu0 0.0
        %828 = vmatpush1.msra.mxu0 0.0
        %829 = vmatprep.subr.mxu0 0.0
        %830 = vmatpush1.msra.mxu0 0.0
        %831 = vmatprep.subr.mxu0 0.0
        %832 = vmatpush1.msra.mxu0 0.0
        %833 = vmatprep.subr.mxu0 0.0
        %834 = vmatpush1.msra.mxu0 0.0
        %835 = vmatprep.subr.mxu0 0.0
        %836 = vmatpush1.msra.mxu0 0.0
        %837 = vmatprep.subr.mxu0 0.0
        %838 = vmatpush1.msra.mxu0 0.0
        %839 = vmatprep.subr.mxu0 0.0
        %840 = vmatpush1.msra.mxu0 0.0
        %841 = vmatprep.subr.mxu0 0.0
        %842 = vmatpush1.msra.mxu0 0.0
        %843 = vmatprep.subr.mxu0 0.0
        %844 = vmatpush1.msra.mxu0 0.0
        %845 = vmatprep.subr.mxu0 0.0
        %846 = vmatpush1.msra.mxu0 0.0
        %847 = vmatprep.subr.mxu0 %v748
        %848 = vmatpush1.msra.mxu0 %v745
        %849 = vmatprep.subr.mxu0 %v713
        %850 = vmatpush1.msra.mxu0 %v712
        %851 = vmatprep.subr.mxu0 %v709
        %852 = vmatpush1.msra.mxu0 %v708
        %853 = vmatprep.subr.mxu0 %v705
        %854 = vmatpush1.msra.mxu0 %v704
        %855 = vmatprep.subr.mxu0 %v701
        %856 = vmatpush1.msra.mxu0 %v700
        %857 = vmatprep.subr.mxu0 %v697
        %858 = vmatpush1.msra.mxu0 %v696
        %859 = vmatprep.subr.mxu0 0.0
        %860 = vmatpush2.msra.mxu0 0.0
        %861 = vmatprep.subr.mxu0 0.0
        %862 = vmatpush2.msra.mxu0 0.0
        %863 = vmatprep.subr.mxu0 0.0
        %864 = vmatpush2.msra.mxu0 0.0
        %865 = vmatprep.subr.mxu0 0.0
        %866 = vmatpush2.msra.mxu0 0.0
        %867 = vmatprep.subr.mxu0 0.0
        %868 = vmatpush2.msra.mxu0 0.0
        %869 = vmatprep.subr.mxu0 0.0
        %870 = vmatpush2.msra.mxu0 0.0
        %871 = vmatprep.subr.mxu0 0.0
        %872 = vmatpush2.msra.mxu0 0.0
        %873 = vmatprep.subr.mxu0 0.0
        %874 = vmatpush2.msra.mxu0 0.0
        %875 = vmatprep.subr.mxu0 0.0
        %876 = vmatpush2.msra.mxu0 0.0
        %877 = vmatprep.subr.mxu0 0.0
        %878 = vmatpush2.msra.mxu0 0.0
        %879 = vmatprep.subr.mxu0 0.0
        %880 = vmatpush2.msra.mxu0 0.0
        %881 = vmatprep.subr.mxu0 0.0
        %882 = vmatpush2.msra.mxu0 0.0
        %883 = vmatprep.subr.mxu0 0.0
        %884 = vmatpush2.msra.mxu0 0.0
        %885 = vmatprep.subr.mxu0 0.0
        %886 = vmatpush2.msra.mxu0 0.0
        %887 = vmatprep.subr.mxu0 0.0
        %888 = vmatpush2.msra.mxu0 0.0
        %889 = vmatprep.subr.mxu0 0.0
        %890 = vmatpush2.msra.mxu0 0.0
        %891 = vmatprep.mubr.f32.mxu0 0.0
        %892 = vmatmul.mubr.f32.gmra.mxu0 %v732
        %v893 = vpop.f32.mrf.mxu0
        %v894 = vadd.f32 %v723, %v893
        %v895 = vpop.f32.mrf.mxu0
        %v896 = vadd.f32 %v723, %v895
        %897 = vmatprep.mubr.f32.mxu0 0.0
        %898 = vmatmul.mubr.f32.gmra.mxu0 %v735
        %v899 = vpop.f32.mrf.mxu0
        %v900 = vadd.f32 %v728, %v899
        %v901 = vpop.f32.mrf.mxu0
        %v902 = vadd.f32 %v728, %v901
        %903 = vdwg.mxu0
        %v904 = vmax.f32 %v817, 0.0
        %v905 = vmax.f32 %v819, 0.0
        %v906 = vmax.f32 %v894, 0.0
        %v907 = vmax.f32 %v896, 0.0
        %v908 = vmax.f32 %v823, 0.0
        %v909 = vmax.f32 %v825, 0.0
        %v910 = vmax.f32 %v900, 0.0
        %v911 = vmax.f32 %v902, 0.0
        %v912 = vmax.f32 %v908, 1.0
        %v913 = vmax.f32 %v909, 1.0
        %v914 = vmax.f32 %v910, 1.0
        %v915 = vmax.f32 %v911, 1.0
        %v916 = vrcp.pop %v912
        %v917 = vrcp.pop %v913
        %v918 = vrcp.pop %v914
        %v919 = vrcp.pop %v915
        %v920 = vmul.f32 %v912, %v916
        %v921 = vmul.f32 %v913, %v917
        %v922 = vmul.f32 %v914, %v918
        %v923 = vmul.f32 %v915, %v919
        %v924 = vsub.f32 2.0, %v920
        %v925 = vsub.f32 2.0, %v921
        %v926 = vsub.f32 2.0, %v922
        %v927 = vsub.f32 2.0, %v923
        %v928 = vmul.f32 %v916, %v924
        %v929 = vmul.f32 %v917, %v925
        %v930 = vmul.f32 %v918, %v926
        %v931 = vmul.f32 %v919, %v927
        %vm932 = vcmp.gt.f32.partialorder %v908, 0.0
        %vm933 = vcmp.gt.f32.partialorder %v909, 0.0
        %vm934 = vcmp.gt.f32.partialorder %v910, 0.0
        %vm935 = vcmp.gt.f32.partialorder %v911, 0.0
        %v936 = vsel %vm932, %v928, 0.0
        %v937 = vsel %vm933, %v929, 0.0
        %v938 = vsel %vm934, %v930, 0.0
        %v939 = vsel %vm935, %v931, 0.0
        %v941 = vlaneseq
        %v942 = vshrl.u32 %v941, 7
        %v943 = vsub.s32 0, %v942
        %v944 = vrot.slane %v333, %v943
        %v945 = vlaneseq
        %v946 = vshrl.u32 %v945, 7
        %v947 = vsub.s32 1, %v946
        %v948 = vrot.slane %v333, %v947
        %v949 = vlaneseq
        %v950 = vshrl.u32 %v949, 7
        %v951 = vsub.s32 2, %v950
        %v952 = vrot.slane %v333, %v951
        %v953 = vlaneseq
        %v954 = vshrl.u32 %v953, 7
        %v955 = vsub.s32 3, %v954
        %v956 = vrot.slane %v333, %v955
        %v961 = vmul.f32 %v936, %v944
        %v962 = vmul.f32 %v937, %v948
        %v963 = vmul.f32 %v938, %v952
        %v964 = vmul.f32 %v939, %v956
        %v965 = vlaneseq
        %v966 = vshrl.u32 %v965, 7
        %v967 = vsub.s32 0, %v966
        %v968 = vrot.slane %v961, %v967
        %v969 = vlaneseq
        %v970 = vshrl.u32 %v969, 7
        %v971 = vsub.s32 0, %v970
        %v972 = vrot.slane %v962, %v971
        %v973 = vlaneseq
        %v974 = vshrl.u32 %v973, 7
        %v975 = vsub.s32 0, %v974
        %v976 = vrot.slane %v963, %v975
        %v977 = vlaneseq
        %v978 = vshrl.u32 %v977, 7
        %v979 = vsub.s32 0, %v978
        %v980 = vrot.slane %v964, %v979
        %v981 = vmul.f32 %v904, %v968
        %v982 = vmul.f32 %v905, %v972
        %v983 = vmul.f32 %v906, %v976
        %v984 = vmul.f32 %v907, %v980
        %vm985 = vcmp.gt.f32.partialorder %v961, 0.0
        %vm986 = vcmp.gt.f32.partialorder %v962, 0.0
        %vm987 = vcmp.gt.f32.partialorder %v963, 0.0
        %vm988 = vcmp.gt.f32.partialorder %v964, 0.0
        %v989 = vsel %vm985, 1, 0
        %v990 = vsel %vm986, 1, 0
        %v991 = vsel %vm987, 1, 0
        %v992 = vsel %vm988, 1, 0
        %v993 = vcvt.s32.f32 %v989
        %v994 = vcvt.s32.f32 %v990
        %v995 = vcvt.s32.f32 %v991
        %v996 = vcvt.s32.f32 %v992
        %997 = vst [vmem:[#allocation3 + $0x8] sm:$0xff] %v981
        %998 = vst [vmem:[#allocation3 + $0x10] sm:$0xff] %v982
        %999 = vst [vmem:[#allocation3 + $0x18] sm:$0xff] %v983
        %1000 = vst [vmem:[#allocation3 + $0x20] sm:$0xff] %v984
        %v1005 = vcombine.low %v993, %v994
        %v1006 = vcombine.low %v995, %v996
        %v1008 = vunpack.c.l.s4 1966171168
        %v1009 = vunpack.c.0.s8 %v1008
        %v1010 = vlaneseq
        %v1011 = vshrl.u32 %v1010, 7
        %v1012 = vsub.s32 %v1009, %v1011
        %v1013 = vrot.slane %v1005, %v1012
        %v1015 = vunpack.c.l.s4 1966171168
        %v1016 = vunpack.c.0.s8 %v1015
        %v1017 = vlaneseq
        %v1018 = vshrl.u32 %v1017, 7
        %v1019 = vsub.s32 %v1016, %v1018
        %v1020 = vrot.slane %v1006, %v1019
        %v1021 = vcombine.low %v1013, %v1020
        %v1023 = vunpack.c.l.s4 1966171168
        %v1024 = vunpack.c.0.s8 %v1023
        %v1025 = vlaneseq
        %v1026 = vshrl.u32 %v1025, 7
        %v1027 = vsub.s32 %v1024, %v1026
        %v1028 = vrot.slane %v1021, %v1027
        %1030 = vst.msk [vmem:[#allocation4 + $0x1] sm:$0xf] %vm381, %v1028
        %v1031 = vld [vmem:[#allocation3] sm:$0xff]
        %v1032 = vld [vmem:[#allocation3 + $0x8] sm:$0xff]
        %v1033 = vld [vmem:[#allocation3 + $0x10] sm:$0xff]
        %v1034 = vld [vmem:[#allocation3 + $0x18] sm:$0xff]
        %v1035 = vld [vmem:[#allocation3 + $0x20] sm:$0xff]
        %1041 = vrot.lane.b32.xlu0 %v1031, 42
        %v1042 = vpop.permute.xlu0 %1041
        %1043 = vrot.lane.b32.xlu0 %v1032, 42
        %v1044 = vpop.permute.xlu0 %1043
        %1045 = vrot.lane.b32.xlu0 %v1033, 42
        %v1046 = vpop.permute.xlu0 %1045
        %1047 = vrot.lane.b32.xlu0 %v1034, 42
        %v1048 = vpop.permute.xlu0 %1047
        %1049 = vrot.lane.b32.xlu0 %v1035, 42
        %v1050 = vpop.permute.xlu0 %1049
        %vm1051 = vcmask 343040
        %v1052 = vsel %vm1051, %v1042, %v1044
        %v1053 = vsel %vm1051, %v1044, %v1046
        %v1054 = vsel %vm1051, %v1046, %v1048
        %v1055 = vsel %vm1051, %v1048, %v1050
        %1060 = vst [vmem:[#allocation2] sm:$0xff] %v1052
        %1061 = vst [vmem:[#allocation2 + $0x8] sm:$0xff] %v1053
        %1062 = vst [vmem:[#allocation2 + $0x10] sm:$0xff] %v1054
        %1063 = vst [vmem:[#allocation2 + $0x18] sm:$0xff] %v1055
        %v1064 = vld [vmem:[#allocation4] sm:$0x1f]
        %1066 = vrot.lane.b32.xlu0 %v1064, 42
        %v1067 = vpop.permute.xlu0 %1066
        %v1068 = vrot.slane %v1067, 1
        %v1069 = vsel %vm1051, %v1067, %v1068
        %s1071 = scalar_lea.vmem [#allocation2], 288
        %1072 = vst.msk [vmem:[%s1071] ss:$8 sm:$0xf] %vm381, %v1069
        %1073 = vst.msk [vmem:[%s1071] ss:$8 sm:$0x0] %vm381, %v1069
        %v1074 = vld [vmem:[#allocation3] sm:$0xff]
        %v1075 = vld [vmem:[#allocation3 + $0x8] sm:$0xff]
        %v1076 = vld [vmem:[#allocation3 + $0x10] sm:$0xff]
        %v1077 = vld [vmem:[#allocation3 + $0x18] sm:$0xff]
        %v1078 = vld [vmem:[#allocation3 + $0x20] sm:$0xff]
        %1084 = vrot.lane.b32.xlu0 %v1074, 40
        %v1085 = vpop.permute.xlu0 %1084
        %1086 = vrot.lane.b32.xlu0 %v1075, 40
        %v1087 = vpop.permute.xlu0 %1086
        %1088 = vrot.lane.b32.xlu0 %v1076, 40
        %v1089 = vpop.permute.xlu0 %1088
        %1090 = vrot.lane.b32.xlu0 %v1077, 40
        %v1091 = vpop.permute.xlu0 %1090
        %1092 = vrot.lane.b32.xlu0 %v1078, 40
        %v1093 = vpop.permute.xlu0 %1092
        %vm1094 = vcmask 326656
        %v1095 = vsel %vm1094, %v1085, %v1087
        %v1096 = vsel %vm1094, %v1087, %v1089
        %v1097 = vsel %vm1094, %v1089, %v1091
        %v1098 = vsel %vm1094, %v1091, %v1093
        %1103 = vst [vmem:[#allocation2 + $0x20] sm:$0xff] %v1095
        %1104 = vst [vmem:[#allocation2 + $0x28] sm:$0xff] %v1096
        %1105 = vst [vmem:[#allocation2 + $0x30] sm:$0xff] %v1097
        %1106 = vst [vmem:[#allocation2 + $0x38] sm:$0xff] %v1098
        %v1107 = vld [vmem:[#allocation4] sm:$0x1f]
        %1109 = vrot.lane.b32.xlu0 %v1107, 40
        %v1110 = vpop.permute.xlu0 %1109
        %v1111 = vrot.slane %v1110, 1
        %v1112 = vsel %vm1094, %v1110, %v1111
        %s1114 = scalar_lea.vmem [#allocation2], 289
        %1115 = vst.msk [vmem:[%s1114] ss:$8 sm:$0xf] %vm381, %v1112
        %1116 = vst.msk [vmem:[%s1114] ss:$8 sm:$0x0] %vm381, %v1112
        %v1117 = vld [vmem:[#allocation3] sm:$0xff]
        %v1118 = vld [vmem:[#allocation3 + $0x8] sm:$0xff]
        %v1119 = vld [vmem:[#allocation3 + $0x10] sm:$0xff]
        %v1120 = vld [vmem:[#allocation3 + $0x18] sm:$0xff]
        %v1121 = vld [vmem:[#allocation3 + $0x20] sm:$0xff]
        %1127 = vrot.lane.b32.xlu0 %v1117, 38
        %v1128 = vpop.permute.xlu0 %1127
        %1129 = vrot.lane.b32.xlu0 %v1118, 38
        %v1130 = vpop.permute.xlu0 %1129
        %1131 = vrot.lane.b32.xlu0 %v1119, 38
        %v1132 = vpop.permute.xlu0 %1131
        %1133 = vrot.lane.b32.xlu0 %v1120, 38
        %v1134 = vpop.permute.xlu0 %1133
        %1135 = vrot.lane.b32.xlu0 %v1121, 38
        %v1136 = vpop.permute.xlu0 %1135
        %vm1137 = vcmask 310272
        %v1138 = vsel %vm1137, %v1128, %v1130
        %v1139 = vsel %vm1137, %v1130, %v1132
        %v1140 = vsel %vm1137, %v1132, %v1134
        %v1141 = vsel %vm1137, %v1134, %v1136
        %1146 = vst [vmem:[#allocation2 + $0x40] sm:$0xff] %v1138
        %1147 = vst [vmem:[#allocation2 + $0x48] sm:$0xff] %v1139
        %1148 = vst [vmem:[#allocation2 + $0x50] sm:$0xff] %v1140
        %1149 = vst [vmem:[#allocation2 + $0x58] sm:$0xff] %v1141
        %v1150 = vld [vmem:[#allocation4] sm:$0x1f]
        %1152 = vrot.lane.b32.xlu0 %v1150, 38
        %v1153 = vpop.permute.xlu0 %1152
        %v1154 = vrot.slane %v1153, 1
        %v1155 = vsel %vm1137, %v1153, %v1154
        %s1157 = scalar_lea.vmem [#allocation2], 290
        %1158 = vst.msk [vmem:[%s1157] ss:$8 sm:$0xf] %vm381, %v1155
        %1159 = vst.msk [vmem:[%s1157] ss:$8 sm:$0x0] %vm381, %v1155
        %v1160 = vld [vmem:[#allocation3] sm:$0xff]
        %v1161 = vld [vmem:[#allocation3 + $0x8] sm:$0xff]
        %v1162 = vld [vmem:[#allocation3 + $0x10] sm:$0xff]
        %v1163 = vld [vmem:[#allocation3 + $0x18] sm:$0xff]
        %v1164 = vld [vmem:[#allocation3 + $0x20] sm:$0xff]
        %1170 = vrot.lane.b32.xlu0 %v1160, 2
        %v1171 = vpop.permute.xlu0 %1170
        %1172 = vrot.lane.b32.xlu0 %v1161, 2
        %v1173 = vpop.permute.xlu0 %1172
        %1174 = vrot.lane.b32.xlu0 %v1162, 2
        %v1175 = vpop.permute.xlu0 %1174
        %1176 = vrot.lane.b32.xlu0 %v1163, 2
        %v1177 = vpop.permute.xlu0 %1176
        %1178 = vrot.lane.b32.xlu0 %v1164, 2
        %v1179 = vpop.permute.xlu0 %1178
        %vm1180 = vcmask 15360
        %v1181 = vsel %vm1180, %v1171, %v1173
        %v1182 = vsel %vm1180, %v1173, %v1175
        %v1183 = vsel %vm1180, %v1175, %v1177
        %v1184 = vsel %vm1180, %v1177, %v1179
        %1189 = vst [vmem:[#allocation2 + $0x60] sm:$0xff] %v1181
        %1190 = vst [vmem:[#allocation2 + $0x68] sm:$0xff] %v1182
        %1191 = vst [vmem:[#allocation2 + $0x70] sm:$0xff] %v1183
        %1192 = vst [vmem:[#allocation2 + $0x78] sm:$0xff] %v1184
        %v1193 = vld [vmem:[#allocation4] sm:$0x1f]
        %1195 = vrot.lane.b32.xlu0 %v1193, 2
        %v1196 = vpop.permute.xlu0 %1195
        %v1197 = vrot.slane %v1196, 1
        %v1198 = vsel %vm1180, %v1196, %v1197
        %s1200 = scalar_lea.vmem [#allocation2], 291
        %1201 = vst.msk [vmem:[%s1200] ss:$8 sm:$0xf] %vm381, %v1198
        %1202 = vst.msk [vmem:[%s1200] ss:$8 sm:$0x0] %vm381, %v1198
        %v1203 = vld [vmem:[#allocation3 + $0x8] sm:$0xff]
        %v1204 = vld [vmem:[#allocation3 + $0x10] sm:$0xff]
        %v1205 = vld [vmem:[#allocation3 + $0x18] sm:$0xff]
        %v1206 = vld [vmem:[#allocation3 + $0x20] sm:$0xff]
        %1207 = vst [vmem:[#allocation2 + $0x80] sm:$0xff] %v1203
        %1208 = vst [vmem:[#allocation2 + $0x88] sm:$0xff] %v1204
        %1209 = vst [vmem:[#allocation2 + $0x90] sm:$0xff] %v1205
        %1210 = vst [vmem:[#allocation2 + $0x98] sm:$0xff] %v1206
        %v1211 = vld [vmem:[#allocation4 + $0x1] sm:$0xf]
        %s1212 = scalar_lea.vmem [#allocation2], 292
        %1213 = vst.msk [vmem:[%s1212] ss:$8 sm:$0xf] %vm381, %v1211
        %1214 = vst.msk [vmem:[%s1212] ss:$8 sm:$0x0] %vm381, %v1211
        %v1215 = vld [vmem:[#allocation3 + $0x8] sm:$0xff]
        %v1216 = vld [vmem:[#allocation3 + $0x10] sm:$0xff]
        %v1217 = vld [vmem:[#allocation3 + $0x18] sm:$0xff]
        %v1218 = vld [vmem:[#allocation3 + $0x20] sm:$0xff]
        %v1219 = vld [vmem:[#allocation3 + $0x28] sm:$0xff]
        %1225 = vrot.lane.b32.xlu0 %v1215, 126
        %v1226 = vpop.permute.xlu0 %1225
        %1227 = vrot.lane.b32.xlu0 %v1216, 126
        %v1228 = vpop.permute.xlu0 %1227
        %1229 = vrot.lane.b32.xlu0 %v1217, 126
        %v1230 = vpop.permute.xlu0 %1229
        %1231 = vrot.lane.b32.xlu0 %v1218, 126
        %v1232 = vpop.permute.xlu0 %1231
        %1233 = vrot.lane.b32.xlu0 %v1219, 126
        %v1234 = vpop.permute.xlu0 %1233
        %vm1235 = vcmask 1031168
        %v1236 = vsel %vm1235, %v1226, %v1228
        %v1237 = vsel %vm1235, %v1228, %v1230
        %v1238 = vsel %vm1235, %v1230, %v1232
        %v1239 = vsel %vm1235, %v1232, %v1234
        %1244 = vst [vmem:[#allocation2 + $0xa0] sm:$0xff] %v1236
        %1245 = vst [vmem:[#allocation2 + $0xa8] sm:$0xff] %v1237
        %1246 = vst [vmem:[#allocation2 + $0xb0] sm:$0xff] %v1238
        %1247 = vst [vmem:[#allocation2 + $0xb8] sm:$0xff] %v1239
        %v1248 = vld [vmem:[#allocation4 + $0x1] sm:$0x1f]
        %1250 = vrot.lane.b32.xlu0 %v1248, 126
        %v1251 = vpop.permute.xlu0 %1250
        %v1252 = vrot.slane %v1251, 1
        %v1253 = vsel %vm1235, %v1251, %v1252
        %s1255 = scalar_lea.vmem [#allocation2], 293
        %1256 = vst.msk [vmem:[%s1255] ss:$8 sm:$0xf] %vm381, %v1253
        %1257 = vst.msk [vmem:[%s1255] ss:$8 sm:$0x0] %vm381, %v1253
        %v1258 = vld [vmem:[#allocation3 + $0x8] sm:$0xff]
        %v1259 = vld [vmem:[#allocation3 + $0x10] sm:$0xff]
        %v1260 = vld [vmem:[#allocation3 + $0x18] sm:$0xff]
        %v1261 = vld [vmem:[#allocation3 + $0x20] sm:$0xff]
        %v1262 = vld [vmem:[#allocation3 + $0x28] sm:$0xff]
        %1268 = vrot.lane.b32.xlu0 %v1258, 90
        %v1269 = vpop.permute.xlu0 %1268
        %1270 = vrot.lane.b32.xlu0 %v1259, 90
        %v1271 = vpop.permute.xlu0 %1270
        %1272 = vrot.lane.b32.xlu0 %v1260, 90
        %v1273 = vpop.permute.xlu0 %1272
        %1274 = vrot.lane.b32.xlu0 %v1261, 90
        %v1275 = vpop.permute.xlu0 %1274
        %1276 = vrot.lane.b32.xlu0 %v1262, 90
        %v1277 = vpop.permute.xlu0 %1276
        %vm1278 = vcmask 736256
        %v1279 = vsel %vm1278, %v1269, %v1271
        %v1280 = vsel %vm1278, %v1271, %v1273
        %v1281 = vsel %vm1278, %v1273, %v1275
        %v1282 = vsel %vm1278, %v1275, %v1277
        %1287 = vst [vmem:[#allocation2 + $0xc0] sm:$0xff] %v1279
        %1288 = vst [vmem:[#allocation2 + $0xc8] sm:$0xff] %v1280
        %1289 = vst [vmem:[#allocation2 + $0xd0] sm:$0xff] %v1281
        %1290 = vst [vmem:[#allocation2 + $0xd8] sm:$0xff] %v1282
        %v1291 = vld [vmem:[#allocation4 + $0x1] sm:$0x1f]
        %1293 = vrot.lane.b32.xlu0 %v1291, 90
        %v1294 = vpop.permute.xlu0 %1293
        %v1295 = vrot.slane %v1294, 1
        %v1296 = vsel %vm1278, %v1294, %v1295
        %s1298 = scalar_lea.vmem [#allocation2], 294
        %1299 = vst.msk [vmem:[%s1298] ss:$8 sm:$0xf] %vm381, %v1296
        %1300 = vst.msk [vmem:[%s1298] ss:$8 sm:$0x0] %vm381, %v1296
        %v1301 = vld [vmem:[#allocation3 + $0x8] sm:$0xff]
        %v1302 = vld [vmem:[#allocation3 + $0x10] sm:$0xff]
        %v1303 = vld [vmem:[#allocation3 + $0x18] sm:$0xff]
        %v1304 = vld [vmem:[#allocation3 + $0x20] sm:$0xff]
        %v1305 = vld [vmem:[#allocation3 + $0x28] sm:$0xff]
        %1311 = vrot.lane.b32.xlu0 %v1301, 88
        %v1312 = vpop.permute.xlu0 %1311
        %1313 = vrot.lane.b32.xlu0 %v1302, 88
        %v1314 = vpop.permute.xlu0 %1313
        %1315 = vrot.lane.b32.xlu0 %v1303, 88
        %v1316 = vpop.permute.xlu0 %1315
        %1317 = vrot.lane.b32.xlu0 %v1304, 88
        %v1318 = vpop.permute.xlu0 %1317
        %1319 = vrot.lane.b32.xlu0 %v1305, 88
        %v1320 = vpop.permute.xlu0 %1319
        %vm1321 = vcmask 719872
        %v1322 = vsel %vm1321, %v1312, %v1314
        %v1323 = vsel %vm1321, %v1314, %v1316
        %v1324 = vsel %vm1321, %v1316, %v1318
        %v1325 = vsel %vm1321, %v1318, %v1320
        %1330 = vst [vmem:[#allocation2 + $0xe0] sm:$0xff] %v1322
        %1331 = vst [vmem:[#allocation2 + $0xe8] sm:$0xff] %v1323
        %1332 = vst [vmem:[#allocation2 + $0xf0] sm:$0xff] %v1324
        %1333 = vst [vmem:[#allocation2 + $0xf8] sm:$0xff] %v1325
        %v1334 = vld [vmem:[#allocation4 + $0x1] sm:$0x1f]
        %1336 = vrot.lane.b32.xlu0 %v1334, 88
        %v1337 = vpop.permute.xlu0 %1336
        %v1338 = vrot.slane %v1337, 1
        %v1339 = vsel %vm1321, %v1337, %v1338
        %s1341 = scalar_lea.vmem [#allocation2], 295
        %1342 = vst.msk [vmem:[%s1341] ss:$8 sm:$0xf] %vm381, %v1339
        %1343 = vst.msk [vmem:[%s1341] ss:$8 sm:$0x0] %vm381, %v1339
        %v1344 = vld [vmem:[#allocation3 + $0x8] sm:$0xff]
        %v1345 = vld [vmem:[#allocation3 + $0x10] sm:$0xff]
        %v1346 = vld [vmem:[#allocation3 + $0x18] sm:$0xff]
        %v1347 = vld [vmem:[#allocation3 + $0x20] sm:$0xff]
        %v1348 = vld [vmem:[#allocation3 + $0x28] sm:$0xff]
        %1354 = vrot.lane.b32.xlu0 %v1344, 86
        %v1355 = vpop.permute.xlu0 %1354
        %1356 = vrot.lane.b32.xlu0 %v1345, 86
        %v1357 = vpop.permute.xlu0 %1356
        %1358 = vrot.lane.b32.xlu0 %v1346, 86
        %v1359 = vpop.permute.xlu0 %1358
        %1360 = vrot.lane.b32.xlu0 %v1347, 86
        %v1361 = vpop.permute.xlu0 %1360
        %1362 = vrot.lane.b32.xlu0 %v1348, 86
        %v1363 = vpop.permute.xlu0 %1362
        %vm1364 = vcmask 703488
        %v1365 = vsel %vm1364, %v1355, %v1357
        %v1366 = vsel %vm1364, %v1357, %v1359
        %v1367 = vsel %vm1364, %v1359, %v1361
        %v1368 = vsel %vm1364, %v1361, %v1363
        %1373 = vst [vmem:[#allocation2 + $0x100] sm:$0xff] %v1365
        %1374 = vst [vmem:[#allocation2 + $0x108] sm:$0xff] %v1366
        %1375 = vst [vmem:[#allocation2 + $0x110] sm:$0xff] %v1367
        %1376 = vst [vmem:[#allocation2 + $0x118] sm:$0xff] %v1368
        %v1377 = vld [vmem:[#allocation4 + $0x1] sm:$0x1f]
        %1379 = vrot.lane.b32.xlu0 %v1377, 86
        %v1380 = vpop.permute.xlu0 %1379
        %v1381 = vrot.slane %v1380, 1
        %v1382 = vsel %vm1364, %v1380, %v1381
        %s1384 = scalar_lea.vmem [#allocation2], 320
        %1385 = vst.msk [vmem:[%s1384] ss:$8 sm:$0xf] %vm381, %v1382
        %1386 = vst.msk [vmem:[%s1384] ss:$8 sm:$0x0] %vm381, %v1382
        %v1387 = vld [vmem:[%s5] sm:$0xff]
        %v1388 = vld [vmem:[%s5 + $0x8] sm:$0x1]
        %v1389 = vld [vmem:[#allocation2] sm:$0xff]
        %v1390 = vld [vmem:[#allocation2 + $0x8] sm:$0xff]
        %v1391 = vld [vmem:[#allocation2 + $0x10] sm:$0xff]
        %v1392 = vld [vmem:[#allocation2 + $0x18] sm:$0xff]
        %v1393 = vld [vmem:[#allocation2 + $0x20] sm:$0xff]
        %v1394 = vld [vmem:[#allocation2 + $0x28] sm:$0xff]
        %v1395 = vld [vmem:[#allocation2 + $0x30] sm:$0xff]
        %v1396 = vld [vmem:[#allocation2 + $0x38] sm:$0xff]
        %v1397 = vld [vmem:[#allocation2 + $0x40] sm:$0xff]
        %v1398 = vld [vmem:[#allocation2 + $0x48] sm:$0xff]
        %v1399 = vld [vmem:[#allocation2 + $0x50] sm:$0xff]
        %v1400 = vld [vmem:[#allocation2 + $0x58] sm:$0xff]
        %v1401 = vld [vmem:[#allocation2 + $0x60] sm:$0xff]
        %v1402 = vld [vmem:[#allocation2 + $0x68] sm:$0xff]
        %v1403 = vld [vmem:[#allocation2 + $0x70] sm:$0xff]
        %v1404 = vld [vmem:[#allocation2 + $0x78] sm:$0xff]
        %v1405 = vld [vmem:[#allocation2 + $0x80] sm:$0xff]
        %v1406 = vld [vmem:[#allocation2 + $0x88] sm:$0xff]
        %v1407 = vld [vmem:[#allocation2 + $0x90] sm:$0xff]
        %v1408 = vld [vmem:[#allocation2 + $0x98] sm:$0xff]
        %v1409 = vld [vmem:[#allocation2 + $0xa0] sm:$0xff]
        %v1410 = vld [vmem:[#allocation2 + $0xa8] sm:$0xff]
        %v1411 = vld [vmem:[#allocation2 + $0xb0] sm:$0xff]
        %v1412 = vld [vmem:[#allocation2 + $0xb8] sm:$0xff]
        %v1413 = vld [vmem:[#allocation2 + $0xc0] sm:$0xff]
        %v1414 = vld [vmem:[#allocation2 + $0xc8] sm:$0xff]
        %v1415 = vld [vmem:[#allocation2 + $0xd0] sm:$0xff]
        %v1416 = vld [vmem:[#allocation2 + $0xd8] sm:$0xff]
        %v1417 = vld [vmem:[#allocation2 + $0xe0] sm:$0xff]
        %v1418 = vld [vmem:[#allocation2 + $0xe8] sm:$0xff]
        %v1419 = vld [vmem:[#allocation2 + $0xf0] sm:$0xff]
        %v1420 = vld [vmem:[#allocation2 + $0xf8] sm:$0xff]
        %v1421 = vld [vmem:[#allocation2 + $0x100] sm:$0xff]
        %v1422 = vld [vmem:[#allocation2 + $0x108] sm:$0xff]
        %v1423 = vld [vmem:[#allocation2 + $0x110] sm:$0xff]
        %v1424 = vld [vmem:[#allocation2 + $0x118] sm:$0xff]
        %v1425 = vld [vmem:[#allocation2 + $0x120] sm:$0xff]
        %v1426 = vld [vmem:[#allocation2 + $0x128] sm:$0xff]
        %v1427 = vld [vmem:[#allocation2 + $0x130] sm:$0xff]
        %v1428 = vld [vmem:[#allocation2 + $0x138] sm:$0xff]
        %v1429 = vld [vmem:[#allocation2 + $0x140] sm:$0x1]
        %v1430 = vld [vmem:[#allocation2 + $0x148] sm:$0x1]
        %v1431 = vld [vmem:[#allocation2 + $0x150] sm:$0x1]
        %v1432 = vld [vmem:[#allocation2 + $0x158] sm:$0x1]
        %v1433 = vld [vmem:[%s6] sm:$0xff]
        %v1434 = vld [vmem:[%s6 + $0x8] sm:$0x1]
        %1436 = vset.pattern.permute.xlu0 0
        %1437 = vperm.xlu0 %1436, %v1433
        %v1438 = vpop.permute.xlu0 %1437
        %1441 = vset.pattern.permute.xlu0 0
        %1442 = vperm.xlu0 %1441, %v1434
        %v1443 = vpop.permute.xlu0 %1442
        %vm1445 = vcmask 662528
        %v1447 = vsel %vm1445, %v1387, 0
        %v1450 = vsel %vm1445, %v1388, 0
        %vm1452 = vcmask 1040384
        %v1454 = vsel %vm1452, %v1429, 0
        %v1457 = vsel %vm1452, %v1430, 0
        %v1460 = vsel %vm1452, %v1431, 0
        %v1463 = vsel %vm1452, %v1432, 0
        %1465 = vmatprep.subr.mxu0 0.0
        %1466 = vmatpush1.msra.mxu0 0.0
        %1467 = vmatprep.subr.mxu0 0.0
        %1468 = vmatpush1.msra.mxu0 0.0
        %1469 = vmatprep.subr.mxu0 0.0
        %1470 = vmatpush1.msra.mxu0 0.0
        %1471 = vmatprep.subr.mxu0 0.0
        %1472 = vmatpush1.msra.mxu0 0.0
        %1473 = vmatprep.subr.mxu0 0.0
        %1474 = vmatpush1.msra.mxu0 0.0
        %1475 = vmatprep.subr.mxu0 %v1457
        %1476 = vmatpush1.msra.mxu0 %v1454
        %1477 = vmatprep.subr.mxu0 %v1426
        %1478 = vmatpush1.msra.mxu0 %v1425
        %1479 = vmatprep.subr.mxu0 %v1422
        %1480 = vmatpush1.msra.mxu0 %v1421
        %1481 = vmatprep.subr.mxu0 %v1418
        %1482 = vmatpush1.msra.mxu0 %v1417
        %1483 = vmatprep.subr.mxu0 %v1414
        %1484 = vmatpush1.msra.mxu0 %v1413
        %1485 = vmatprep.subr.mxu0 %v1410
        %1486 = vmatpush1.msra.mxu0 %v1409
        %1487 = vmatprep.subr.mxu0 %v1406
        %1488 = vmatpush1.msra.mxu0 %v1405
        %1489 = vmatprep.subr.mxu0 %v1402
        %1490 = vmatpush1.msra.mxu0 %v1401
        %1491 = vmatprep.subr.mxu0 %v1398
        %1492 = vmatpush1.msra.mxu0 %v1397
        %1493 = vmatprep.subr.mxu0 %v1394
        %1494 = vmatpush1.msra.mxu0 %v1393
        %1495 = vmatprep.subr.mxu0 %v1390
        %1496 = vmatpush1.msra.mxu0 %v1389
        %1497 = vmatprep.subr.mxu0 0.0
        %1498 = vmatpush2.msra.mxu0 0.0
        %1499 = vmatprep.subr.mxu0 0.0
        %1500 = vmatpush2.msra.mxu0 0.0
        %1501 = vmatprep.subr.mxu0 0.0
        %1502 = vmatpush2.msra.mxu0 0.0
        %1503 = vmatprep.subr.mxu0 0.0
        %1504 = vmatpush2.msra.mxu0 0.0
        %1505 = vmatprep.subr.mxu0 0.0
        %1506 = vmatpush2.msra.mxu0 0.0
        %1507 = vmatprep.subr.mxu0 0.0
        %1508 = vmatpush2.msra.mxu0 0.0
        %1509 = vmatprep.subr.mxu0 0.0
        %1510 = vmatpush2.msra.mxu0 0.0
        %1511 = vmatprep.subr.mxu0 0.0
        %1512 = vmatpush2.msra.mxu0 0.0
        %1513 = vmatprep.subr.mxu0 0.0
        %1514 = vmatpush2.msra.mxu0 0.0
        %1515 = vmatprep.subr.mxu0 0.0
        %1516 = vmatpush2.msra.mxu0 0.0
        %1517 = vmatprep.subr.mxu0 0.0
        %1518 = vmatpush2.msra.mxu0 0.0
        %1519 = vmatprep.subr.mxu0 0.0
        %1520 = vmatpush2.msra.mxu0 0.0
        %1521 = vmatprep.subr.mxu0 0.0
        %1522 = vmatpush2.msra.mxu0 0.0
        %1523 = vmatprep.subr.mxu0 0.0
        %1524 = vmatpush2.msra.mxu0 0.0
        %1525 = vmatprep.subr.mxu0 0.0
        %1526 = vmatpush2.msra.mxu0 0.0
        %1527 = vmatprep.subr.mxu0 0.0
        %1528 = vmatpush2.msra.mxu0 0.0
        %1529 = vmatprep.mubr.f32.mxu0 0.0
        %1530 = vmatmul.mubr.f32.gmra.mxu0 %v1447
        %v1531 = vpop.f32.mrf.mxu0
        %v1532 = vadd.f32 %v1438, %v1531
        %v1533 = vpop.f32.mrf.mxu0
        %v1534 = vadd.f32 %v1438, %v1533
        %1535 = vmatprep.mubr.f32.mxu0 0.0
        %1536 = vmatmul.mubr.f32.gmra.mxu0 %v1450
        %v1537 = vpop.f32.mrf.mxu0
        %v1538 = vadd.f32 %v1443, %v1537
        %v1539 = vpop.f32.mrf.mxu0
        %v1540 = vadd.f32 %v1443, %v1539
        %1541 = vdwg.mxu0
        %1542 = vmatprep.subr.mxu0 0.0
        %1543 = vmatpush1.msra.mxu0 0.0
        %1544 = vmatprep.subr.mxu0 0.0
        %1545 = vmatpush1.msra.mxu0 0.0
        %1546 = vmatprep.subr.mxu0 0.0
        %1547 = vmatpush1.msra.mxu0 0.0
        %1548 = vmatprep.subr.mxu0 0.0
        %1549 = vmatpush1.msra.mxu0 0.0
        %1550 = vmatprep.subr.mxu0 0.0
        %1551 = vmatpush1.msra.mxu0 0.0
        %1552 = vmatprep.subr.mxu0 %v1463
        %1553 = vmatpush1.msra.mxu0 %v1460
        %1554 = vmatprep.subr.mxu0 %v1428
        %1555 = vmatpush1.msra.mxu0 %v1427
        %1556 = vmatprep.subr.mxu0 %v1424
        %1557 = vmatpush1.msra.mxu0 %v1423
        %1558 = vmatprep.subr.mxu0 %v1420
        %1559 = vmatpush1.msra.mxu0 %v1419
        %1560 = vmatprep.subr.mxu0 %v1416
        %1561 = vmatpush1.msra.mxu0 %v1415
        %1562 = vmatprep.subr.mxu0 %v1412
        %1563 = vmatpush1.msra.mxu0 %v1411
        %1564 = vmatprep.subr.mxu0 %v1408
        %1565 = vmatpush1.msra.mxu0 %v1407
        %1566 = vmatprep.subr.mxu0 %v1404
        %1567 = vmatpush1.msra.mxu0 %v1403
        %1568 = vmatprep.subr.mxu0 %v1400
        %1569 = vmatpush1.msra.mxu0 %v1399
        %1570 = vmatprep.subr.mxu0 %v1396
        %1571 = vmatpush1.msra.mxu0 %v1395
        %1572 = vmatprep.subr.mxu0 %v1392
        %1573 = vmatpush1.msra.mxu0 %v1391
        %1574 = vmatprep.subr.mxu0 0.0
        %1575 = vmatpush2.msra.mxu0 0.0
        %1576 = vmatprep.subr.mxu0 0.0
        %1577 = vmatpush2.msra.mxu0 0.0
        %1578 = vmatprep.subr.mxu0 0.0
        %1579 = vmatpush2.msra.mxu0 0.0
        %1580 = vmatprep.subr.mxu0 0.0
        %1581 = vmatpush2.msra.mxu0 0.0
        %1582 = vmatprep.subr.mxu0 0.0
        %1583 = vmatpush2.msra.mxu0 0.0
        %1584 = vmatprep.subr.mxu0 0.0
        %1585 = vmatpush2.msra.mxu0 0.0
        %1586 = vmatprep.subr.mxu0 0.0
        %1587 = vmatpush2.msra.mxu0 0.0
        %1588 = vmatprep.subr.mxu0 0.0
        %1589 = vmatpush2.msra.mxu0 0.0
        %1590 = vmatprep.subr.mxu0 0.0
        %1591 = vmatpush2.msra.mxu0 0.0
        %1592 = vmatprep.subr.mxu0 0.0
        %1593 = vmatpush2.msra.mxu0 0.0
        %1594 = vmatprep.subr.mxu0 0.0
        %1595 = vmatpush2.msra.mxu0 0.0
        %1596 = vmatprep.subr.mxu0 0.0
        %1597 = vmatpush2.msra.mxu0 0.0
        %1598 = vmatprep.subr.mxu0 0.0
        %1599 = vmatpush2.msra.mxu0 0.0
        %1600 = vmatprep.subr.mxu0 0.0
        %1601 = vmatpush2.msra.mxu0 0.0
        %1602 = vmatprep.subr.mxu0 0.0
        %1603 = vmatpush2.msra.mxu0 0.0
        %1604 = vmatprep.subr.mxu0 0.0
        %1605 = vmatpush2.msra.mxu0 0.0
        %1606 = vmatprep.mubr.f32.mxu0 0.0
        %1607 = vmatmul.mubr.f32.gmra.mxu0 %v1447
        %v1608 = vpop.f32.mrf.mxu0
        %v1609 = vadd.f32 %v1438, %v1608
        %v1610 = vpop.f32.mrf.mxu0
        %v1611 = vadd.f32 %v1438, %v1610
        %1612 = vmatprep.mubr.f32.mxu0 0.0
        %1613 = vmatmul.mubr.f32.gmra.mxu0 %v1450
        %v1614 = vpop.f32.mrf.mxu0
        %v1615 = vadd.f32 %v1443, %v1614
        %v1616 = vpop.f32.mrf.mxu0
        %v1617 = vadd.f32 %v1443, %v1616
        %1618 = vdwg.mxu0
        %v1619 = vmax.f32 %v1532, 0.0
        %v1620 = vmax.f32 %v1534, 0.0
        %v1621 = vmax.f32 %v1609, 0.0
        %v1622 = vmax.f32 %v1611, 0.0
        %v1623 = vmax.f32 %v1538, 0.0
        %v1624 = vmax.f32 %v1540, 0.0
        %v1625 = vmax.f32 %v1615, 0.0
        %v1626 = vmax.f32 %v1617, 0.0
        %v1627 = vmax.f32 %v1623, 1.0
        %v1628 = vmax.f32 %v1624, 1.0
        %v1629 = vmax.f32 %v1625, 1.0
        %v1630 = vmax.f32 %v1626, 1.0
        %v1631 = vrcp.pop %v1627
        %v1632 = vrcp.pop %v1628
        %v1633 = vrcp.pop %v1629
        %v1634 = vrcp.pop %v1630
        %v1635 = vmul.f32 %v1627, %v1631
        %v1636 = vmul.f32 %v1628, %v1632
        %v1637 = vmul.f32 %v1629, %v1633
        %v1638 = vmul.f32 %v1630, %v1634
        %v1639 = vsub.f32 2.0, %v1635
        %v1640 = vsub.f32 2.0, %v1636
        %v1641 = vsub.f32 2.0, %v1637
        %v1642 = vsub.f32 2.0, %v1638
        %v1643 = vmul.f32 %v1631, %v1639
        %v1644 = vmul.f32 %v1632, %v1640
        %v1645 = vmul.f32 %v1633, %v1641
        %v1646 = vmul.f32 %v1634, %v1642
        %vm1647 = vcmp.gt.f32.partialorder %v1623, 0.0
        %vm1648 = vcmp.gt.f32.partialorder %v1624, 0.0
        %vm1649 = vcmp.gt.f32.partialorder %v1625, 0.0
        %vm1650 = vcmp.gt.f32.partialorder %v1626, 0.0
        %v1651 = vsel %vm1647, %v1643, 0.0
        %v1652 = vsel %vm1648, %v1644, 0.0
        %v1653 = vsel %vm1649, %v1645, 0.0
        %v1654 = vsel %vm1650, %v1646, 0.0
        %v1655 = vmul.f32 %v1651, %v944
        %v1656 = vmul.f32 %v1652, %v948
        %v1657 = vmul.f32 %v1653, %v952
        %v1658 = vmul.f32 %v1654, %v956
        %v1659 = vlaneseq
        %v1660 = vshrl.u32 %v1659, 7
        %v1661 = vsub.s32 0, %v1660
        %v1662 = vrot.slane %v1655, %v1661
        %v1663 = vlaneseq
        %v1664 = vshrl.u32 %v1663, 7
        %v1665 = vsub.s32 0, %v1664
        %v1666 = vrot.slane %v1656, %v1665
        %v1667 = vlaneseq
        %v1668 = vshrl.u32 %v1667, 7
        %v1669 = vsub.s32 0, %v1668
        %v1670 = vrot.slane %v1657, %v1669
        %v1671 = vlaneseq
        %v1672 = vshrl.u32 %v1671, 7
        %v1673 = vsub.s32 0, %v1672
        %v1674 = vrot.slane %v1658, %v1673
        %v1675 = vmul.f32 %v1619, %v1662
        %v1676 = vmul.f32 %v1620, %v1666
        %v1677 = vmul.f32 %v1621, %v1670
        %v1678 = vmul.f32 %v1622, %v1674
        %1679 = vst [vmem:[%s332] sm:$0xff] %v1675
        %1680 = vst [vmem:[%s332 + $0x8] sm:$0xff] %v1676
        %1681 = vst [vmem:[%s332 + $0x10] sm:$0xff] %v1677
        %1682 = vst [vmem:[%s332 + $0x18] sm:$0xff] %v1678
        %s1683 = sand.u32 %s192, 1
        %s1684 = scalar_lea.sflag [#allocation7], %s1683
        %s1685 = sand.u32 %s192, 1
        %s1686 = smul.addr %s1685, 32
        %s1687 = scalar_lea.vmem [#allocation10], %s1686
        // Predicated region
        $region57: #{tpu_custom_call.1} parent=47 // pred_check
          %p1688 = pneg %p202
        $region58: #{tpu_custom_call.1} parent=47 // pred_check_branch
          %1690 = sbr.rel (%p1688) target = $region60
        $region59: #{tpu_custom_call.1} parent=47 // pred_region
          %s1692 = ssub.s32 512, 512
          %1693 = vsyncadd %s1684, %s1692
          %s1694 = smul.addr %s27, 4
          %s1695 = smul.addr %s1694, 128
          %s1696 = scalar_lea.hbm %s7, %s1695
          %s1698 = sshll.u32 %s1687, 4
          %s1699 = int_to_ptr.vmem [resolvable:$true] %s1698
          %1701 = dma.vmem_to_hbm [thread:$0]  %s1699, 512, %s1696, %s1684
        $region60: #{tpu_custom_call.1} parent=47 // pred_fallthru
          _
      $region48: #{tpu_custom_call.1} parent=5 // pred_fallthru
        _
      %p1702 = scmp.le.s32.totalorder 2, %s22
      // Predicated region
      $region61: #{tpu_custom_call.1} parent=5 // pred_check
        %p1703 = pneg %p1702
      $region62: #{tpu_custom_call.1} parent=5 // pred_check_branch
        %1705 = sbr.rel (%p1703) target = $region64
      $region63: #{tpu_custom_call.1} parent=5 // pred_region
        %s1706 = ssub.s32 %s22, 2
        // Predicated region
        $region65: #{tpu_custom_call.1} parent=63 // pred_check
          %p1707 = pneg %p208
        $region66: #{tpu_custom_call.1} parent=63 // pred_check_branch
          %1709 = sbr.rel (%p1707) target = $region68
        $region67: #{tpu_custom_call.1} parent=63 // pred_region
          %s1710 = sand.u32 %s193, 1
          %s1711 = scalar_lea.sflag [#allocation7], %s1710
          %s1712 = sand.u32 %s193, 1
          %s1713 = smul.addr %s1712, 32
          %s1714 = scalar_lea.vmem [#allocation10], %s1713
          %1715 = dma.done %s1711, 512
        $region68: #{tpu_custom_call.1} parent=63 // pred_fallthru
          _
      $region64: #{tpu_custom_call.1} parent=5 // pred_fallthru
        _
    $region6: #{tpu_custom_call.1} parent=1 // loop_footer
      %s26 = sadd.s32 1, %s22
    $region7: #{tpu_custom_call.1} parent=1 // loop_footer_branch
      %21 = sbr.rel target = $region3
    $region8: #{tpu_custom_call.1} parent=1 // loop_exit
      _
    %1716 = vsyncpa [#allocation6], 1
    %s1717 = scalar_lea.sflag [#allocation6], 1
    %1718 = vsyncpa %s1717, 1
    %1719 = vsyncpa [#allocation9], 1
    %s1720 = scalar_lea.sflag [#allocation9], 1
    %1721 = vsyncpa %s1720, 1
    %1722 = vsyncpa [#allocation7], 1
    %s1723 = scalar_lea.sflag [#allocation7], 1
    %1724 = vsyncpa %s1723, 1

</llo_original>
